<compile_context>
chip_gen: v7x
topology: tpu7x:2x2x1
jax: 0.10.0
libtpu: 0.0.40
codegen_flags: <defaults>
</compile_context>

<pallas_src>
import jax
import jax.numpy as jnp
from jax.experimental import pallas as pl
from jax.experimental.pallas import tpu as pltpu

KH = KW = 3
H = W = 32
CIN = 3
COUT = 64
NUM_CLASSES = 10
EPS = 1e-5
K_TAPS = KH * KW * CIN            # 27
HP, WP = H // 2, W // 2           # 16, 16
NPOOL = HP * WP                   # 256 pooled pixels per image
NPIX = H * W                      # 1024 conv pixels per image
FC_IN = COUT * NPOOL              # 16384
BATCH_BLOCK = 8                   # images per conv grid step


def conv_bn_relu_pool_kernel(x_ref, w_ref, scale_ref, bias_ref, o_ref):
    """Fused im2col-Conv3x3 + BN(eval) + ReLU + MaxPool2 for a block of B images.

    x_ref:     (B, 27, 1024)  patches; taps on sublanes, pixels on lanes,
                              pixel order = (pool_phase, ph, pw).
    w_ref:     (B, 64, 27)    conv weights tiled over the batch dim.
    scale_ref: (1, 64, 1)     folded BN scale.
    bias_ref:  (1, 64, 1)     folded BN bias (includes conv bias).
    o_ref:     (B, 64, 256)   pooled output; channels on sublanes, pooled
                              pixels (ph, pw) on lanes — fully lane-dense.
    """
    # Single batched MXU matmul: (B, 64, 27) x (B, 27, 1024) -> (B, 64, 1024).
    y = jax.lax.dot_general(
        w_ref[...], x_ref[...],
        dimension_numbers=(((2,), (1,)), ((0,), (0,))),
        preferred_element_type=jnp.float32)

    # Folded BatchNorm (eval mode, incl. conv bias) + ReLU, applied per
    # pre-pool pixel (required before the pool max since gamma may be < 0).
    y = jnp.maximum(y * scale_ref[...] + bias_ref[...], 0.0)

    # MaxPool2d(2): the four pool phases are contiguous, 128-aligned 256-lane
    # slabs of the pixel axis -> pure in-register slab max (no scratch).
    p01 = jnp.maximum(y[:, :, 0 * NPOOL:1 * NPOOL], y[:, :, 1 * NPOOL:2 * NPOOL])
    p23 = jnp.maximum(y[:, :, 2 * NPOOL:3 * NPOOL], y[:, :, 3 * NPOOL:4 * NPOOL])
    o_ref[...] = jnp.maximum(p01, p23).astype(o_ref.dtype)


def fc_kernel(x_ref, w_ref, b_ref, o_ref):
    """Linear head for a row block: (Bf, 16384) contracted with (10, 16384) + bias."""
    logits = jax.lax.dot_general(
        x_ref[...], w_ref[...],
        dimension_numbers=(((1,), (1,)), ((), ())),
        preferred_element_type=jnp.float32)
    o_ref[...] = (logits + b_ref[...]).astype(o_ref.dtype)


def kernel_size_cnn_forward(x_nchw, params, batch_block=BATCH_BLOCK):
    (conv_w, conv_b, bn_gamma, bn_beta, bn_mean, bn_var, fc_w, fc_b) = params
    N = x_nchw.shape[0]

    # ---- batch blocking / padding (pad the raw input, not the 9x patches) ----
    B = min(batch_block, N)
    n_blocks = pl.cdiv(N, B)
    Np = n_blocks * B

    x_nhwc = jnp.transpose(x_nchw, (0, 2, 3, 1)).astype(jnp.float32)      # (N, H, W, CIN)
    if Np != N:
        x_nhwc = jnp.pad(x_nhwc, ((0, Np - N), (0, 0), (0, 0), (0, 0)))

    # ---- glue: im2col with taps on the sublane axis and phase-major pixels ----
    x_pad = jnp.pad(x_nhwc, ((0, 0), (1, 1), (1, 1), (0, 0)))             # (Np, H+2, W+2, CIN)
    taps = jnp.stack(
        [x_pad[:, kh:kh + H, kw:kw + W, :] for kh in range(KH) for kw in range(KW)],
        axis=1)                                                           # (Np, 9, H, W, CIN)
    taps = taps.reshape(Np, KH * KW, HP, 2, WP, 2, CIN)
    taps = jnp.transpose(taps, (0, 1, 6, 3, 5, 2, 4))                     # (Np, 9, CIN, 2, 2, HP, WP)
    patches = taps.reshape(Np, K_TAPS, NPIX)     # tap=(kh,kw,cin); pixel=(phase,ph,pw)

    # conv weights -> (COUT, 27) with tap order (kh, kw, cin); tiled for the batched dot.
    w2 = jnp.transpose(conv_w, (0, 2, 3, 1)).reshape(COUT, K_TAPS).astype(jnp.float32)
    w_tiled = jnp.broadcast_to(w2[None], (B, COUT, K_TAPS))

    # folded eval-mode BatchNorm (includes the conv bias).
    scale = (bn_gamma / jnp.sqrt(bn_var + EPS)).astype(jnp.float32)
    bias = ((conv_b - bn_mean) * scale + bn_beta).astype(jnp.float32)
    scale3 = scale.reshape(1, COUT, 1)
    bias3 = bias.reshape(1, COUT, 1)

    # ---- kernel 1: conv + BN + ReLU + maxpool, B images per grid step ----
    pooled = pl.pallas_call(
        conv_bn_relu_pool_kernel,
        out_shape=jax.ShapeDtypeStruct((Np, COUT, NPOOL), jnp.float32),
        grid_spec=pltpu.PrefetchScalarGridSpec(
            num_scalar_prefetch=0,
            grid=(n_blocks,),
            in_specs=[
                pl.BlockSpec((B, K_TAPS, NPIX), lambda n: (n, 0, 0)),
                pl.BlockSpec((B, COUT, K_TAPS), lambda n: (0, 0, 0)),
                pl.BlockSpec((1, COUT, 1), lambda n: (0, 0, 0)),
                pl.BlockSpec((1, COUT, 1), lambda n: (0, 0, 0)),
            ],
            out_specs=pl.BlockSpec((B, COUT, NPOOL), lambda n: (n, 0, 0)),
        ),
        compiler_params=pltpu.CompilerParams(
            dimension_semantics=("parallel",),
            vmem_limit_bytes=32 * 1024 * 1024),
    )(patches, w_tiled, scale3, bias3)

    # per-image feature order is (c, ph, pw) == torch x.view(N, -1), so fc_w is
    # used untouched; this reshape is the single remaining XLA relayout copy.
    feat = pooled.reshape(Np, FC_IN)

    # ---- kernel 2: fully connected head, gridded over row blocks ----
    if Np % 8 == 0:
        fc_blk = max(b for b in (64, 32, 16, 8) if Np % b == 0)
    else:
        fc_blk = Np
    n_fc = Np // fc_blk
    fc_w2 = fc_w.astype(jnp.float32)                                      # (10, 16384), lane-dense
    fc_b2 = fc_b.reshape(1, NUM_CLASSES).astype(jnp.float32)

    logits = pl.pallas_call(
        fc_kernel,
        out_shape=jax.ShapeDtypeStruct((Np, NUM_CLASSES), jnp.float32),
        grid_spec=pltpu.PrefetchScalarGridSpec(
            num_scalar_prefetch=0,
            grid=(n_fc,),
            in_specs=[
                pl.BlockSpec((fc_blk, FC_IN), lambda n: (n, 0)),
                pl.BlockSpec((NUM_CLASSES, FC_IN), lambda n: (0, 0)),
                pl.BlockSpec((1, NUM_CLASSES), lambda n: (0, 0)),
            ],
            out_specs=pl.BlockSpec((fc_blk, NUM_CLASSES), lambda n: (n, 0)),
        ),
        compiler_params=pltpu.CompilerParams(
            dimension_semantics=("parallel",),
            vmem_limit_bytes=32 * 1024 * 1024),
    )(feat, fc_w2, fc_b2)

    return logits[:N]


if __name__ == "__main__":
    key = jax.random.PRNGKey(0)
    k = jax.random.split(key, 6)

    # Deterministic synthetic parameters (shapes follow the PyTorch module).
    conv_w = jax.random.normal(k[0], (COUT, CIN, KH, KW), jnp.float32) * 0.05
    conv_b = jax.random.normal(k[1], (COUT,), jnp.float32) * 0.05
    bn_gamma = jnp.ones((COUT,), jnp.float32)
    bn_beta = jnp.zeros((COUT,), jnp.float32)
    bn_mean = jnp.zeros((COUT,), jnp.float32)
    bn_var = jnp.ones((COUT,), jnp.float32)
    fc_w = jax.random.normal(k[2], (NUM_CLASSES, FC_IN), jnp.float32) * 0.01
    fc_b = jax.random.normal(k[3], (NUM_CLASSES,), jnp.float32) * 0.01
    params = (conv_w, conv_b, bn_gamma, bn_beta, bn_mean, bn_var, fc_w, fc_b)

    # Input must be 32x32 spatially (the module's fc_input_size assumes 32x32).
    x = jax.random.normal(k[4], (2, CIN, H, W), jnp.float32)

    out = kernel_size_cnn_forward(x, params)
    jax.block_until_ready(out)
    assert out.shape == (2, NUM_CLASSES) and out.dtype == jnp.float32
    assert bool(jnp.all(jnp.isfinite(out)))
    print("KERNEL_OK")
</pallas_src>

<mosaic_0001>
module attributes {stable_mosaic.version = 11 : i64} {
  func.func @conv_bn_relu_pool_kernel(%arg0: i32, %arg1: memref<2x27x1024xf32, #tpu.memory_space<vmem>>, %arg2: memref<2x64x27xf32, #tpu.memory_space<vmem>>, %arg3: memref<1x64x1xf32, #tpu.memory_space<vmem>>, %arg4: memref<1x64x1xf32, #tpu.memory_space<vmem>>, %arg5: memref<2x64x256xf32, #tpu.memory_space<vmem>>) attributes {dimension_semantics = [#tpu.dimension_semantics<parallel>], iteration_bounds = array<i64: 1>, scalar_prefetch = 0 : i64, scratch_operands = 0 : i64, tpu.core_type = #tpu.core_type<tc>, window_params = [{transform_indices = @transform_0, window_bounds = array<i64: 2, 27, 1024>}, {pipeline_mode = #tpu.pipeline_mode<synchronous>, transform_indices = @transform_1, window_bounds = array<i64: 2, 64, 27>}, {pipeline_mode = #tpu.pipeline_mode<synchronous>, transform_indices = @transform_2, window_bounds = array<i64: 1, 64, 1>}, {pipeline_mode = #tpu.pipeline_mode<synchronous>, transform_indices = @transform_3, window_bounds = array<i64: 1, 64, 1>}, {transform_indices = @transform_4, window_bounds = array<i64: 2, 64, 256>}]} {
    %c0 = arith.constant 0 : index
    %c0_0 = arith.constant 0 : index
    %c0_1 = arith.constant 0 : index
    %0 = vector.load %arg2[%c0, %c0_0, %c0_1] : memref<2x64x27xf32, #tpu.memory_space<vmem>>, vector<2x64x27xf32>
    %c0_2 = arith.constant 0 : index
    %c0_3 = arith.constant 0 : index
    %c0_4 = arith.constant 0 : index
    %1 = vector.load %arg1[%c0_2, %c0_3, %c0_4] : memref<2x27x1024xf32, #tpu.memory_space<vmem>>, vector<2x27x1024xf32>
    %cst = arith.constant dense<0.000000e+00> : vector<2x64x1024xf32>
    %2 = tpu.matmul %0, %1, %cst {dimension_numbers = #tpu.dot_dimension_numbers<[2], [1], [1], [2], [0, 0, 0, 1, 1, 2], [0], [0]>} : vector<2x64x27xf32>, vector<2x27x1024xf32>, vector<2x64x1024xf32> -> vector<2x64x1024xf32>
    %c0_5 = arith.constant 0 : index
    %c0_6 = arith.constant 0 : index
    %c0_7 = arith.constant 0 : index
    %3 = vector.load %arg3[%c0_5, %c0_6, %c0_7] : memref<1x64x1xf32, #tpu.memory_space<vmem>>, vector<1x64x1xf32>
    %4 = vector.broadcast %3 : vector<1x64x1xf32> to vector<2x64x1024xf32>
    %5 = arith.mulf %2, %4 : vector<2x64x1024xf32>
    %c0_8 = arith.constant 0 : index
    %c0_9 = arith.constant 0 : index
    %c0_10 = arith.constant 0 : index
    %6 = vector.load %arg4[%c0_8, %c0_9, %c0_10] : memref<1x64x1xf32, #tpu.memory_space<vmem>>, vector<1x64x1xf32>
    %7 = vector.broadcast %6 : vector<1x64x1xf32> to vector<2x64x1024xf32>
    %8 = arith.addf %5, %7 : vector<2x64x1024xf32>
    %cst_11 = arith.constant 0.000000e+00 : f32
    %9 = vector.broadcast %cst_11 : f32 to vector<2x64x1024xf32>
    %10 = arith.maximumf %8, %9 : vector<2x64x1024xf32>
    %11 = vector.extract_strided_slice %10 {offsets = [0, 0, 0], sizes = [2, 64, 256], strides = [1, 1, 1]} : vector<2x64x1024xf32> to vector<2x64x256xf32>
    %12 = vector.extract_strided_slice %10 {offsets = [0, 0, 256], sizes = [2, 64, 256], strides = [1, 1, 1]} : vector<2x64x1024xf32> to vector<2x64x256xf32>
    %13 = arith.maximumf %11, %12 : vector<2x64x256xf32>
    %14 = vector.extract_strided_slice %10 {offsets = [0, 0, 512], sizes = [2, 64, 256], strides = [1, 1, 1]} : vector<2x64x1024xf32> to vector<2x64x256xf32>
    %15 = vector.extract_strided_slice %10 {offsets = [0, 0, 768], sizes = [2, 64, 256], strides = [1, 1, 1]} : vector<2x64x1024xf32> to vector<2x64x256xf32>
    %16 = arith.maximumf %14, %15 : vector<2x64x256xf32>
    %17 = arith.maximumf %13, %16 : vector<2x64x256xf32>
    %c0_12 = arith.constant 0 : index
    %c0_13 = arith.constant 0 : index
    %c0_14 = arith.constant 0 : index
    %18 = vector.load %arg5[%c0_12, %c0_13, %c0_14] : memref<2x64x256xf32, #tpu.memory_space<vmem>>, vector<2x64x256xf32>
    tpu.vector_store %arg5[%c0_12, %c0_13, %c0_14], %17 {strides = array<i32>} : memref<2x64x256xf32, #tpu.memory_space<vmem>>, vector<2x64x256xf32>,
    return
  }
  func.func @transform_0(%arg0: i32) -> (i32, i32, i32) {
    %c0_i32 = arith.constant 0 : i32
    %c0_i32_0 = arith.constant 0 : i32
    %c0_i32_1 = arith.constant 0 : i32
    return %arg0, %c0_i32, %c0_i32_0 : i32, i32, i32
  }
  func.func @transform_1(%arg0: i32) -> (i32, i32, i32) {
    %c0_i32 = arith.constant 0 : i32
    %c0_i32_0 = arith.constant 0 : i32
    %c0_i32_1 = arith.constant 0 : i32
    %c0_i32_2 = arith.constant 0 : i32
    return %c0_i32, %c0_i32_0, %c0_i32_1 : i32, i32, i32
  }
  func.func @transform_2(%arg0: i32) -> (i32, i32, i32) {
    %c0_i32 = arith.constant 0 : i32
    %c0_i32_0 = arith.constant 0 : i32
    %c0_i32_1 = arith.constant 0 : i32
    %c0_i32_2 = arith.constant 0 : i32
    return %c0_i32, %c0_i32_0, %c0_i32_1 : i32, i32, i32
  }
  func.func @transform_3(%arg0: i32) -> (i32, i32, i32) {
    %c0_i32 = arith.constant 0 : i32
    %c0_i32_0 = arith.constant 0 : i32
    %c0_i32_1 = arith.constant 0 : i32
    %c0_i32_2 = arith.constant 0 : i32
    return %c0_i32, %c0_i32_0, %c0_i32_1 : i32, i32, i32
  }
  func.func @transform_4(%arg0: i32) -> (i32, i32, i32) {
    %c0_i32 = arith.constant 0 : i32
    %c0_i32_0 = arith.constant 0 : i32
    %c0_i32_1 = arith.constant 0 : i32
    return %arg0, %c0_i32, %c0_i32_0 : i32, i32, i32
  }
}

</mosaic_0001>

<llo_original>
// kernel: tpu_custom_call.1
$region0: #{tpu_custom_call.1}
  #allocation0 [shape = 'u32[]', space=smem, size = 0x4, offset = 0x4, fixed_abs, tag = 'smem constant byte address 0x4 - core index']
  #allocation1 [shape = 'u32[144,128]{1,0:T(1,128)}', space=vmem, size = 0x12000, scoped, tag = 'internal scratch']
  %s0 = inlined_call_operand.vmem [shape: f32[2,27,1024], index: 0, kind: input, shape index: {}]
  %s1 = inlined_call_operand.vmem [shape: f32[2,64,27], index: 1, kind: input, shape index: {}]
  %s2 = inlined_call_operand.vmem [shape: f32[1,64,1], index: 2, kind: input, shape index: {}]
  %s3 = inlined_call_operand.vmem [shape: f32[1,64,1], index: 3, kind: input, shape index: {}]
  %s4 = inlined_call_operand.hbm [shape: f32[2,64,256], index: 4, kind: output, shape index: {}]
  %s5 = sld [smem:[#allocation0]]
  $region26: #{tpu_custom_call.1} parent=0
    _
  %s7 = ssub.s32 1, %s5
  %s8 = scalar_select 0, %s7, %s5
  $region1: #{tpu_custom_call.1} parent=0
    #allocation2 [shape = 'u8[131072]{0}', space=vmem, size = 0x20000, scoped, tag = 'output window, operand 0, single buffered']
    #allocation3 [shape = 's32[1]{0}', space=sflag, size = 0x4, scoped, tag = 'scoped memory for tpu_custom_call.1']
    %9 = vsyncpa [#allocation3], 0
    // Predicated region
    $region2: #{tpu_custom_call.1} parent=1 // pred_check
      _
    $region3: #{tpu_custom_call.1} parent=1 // pred_check_branch
      %11 = sbr.rel (0) target = $region5
    $region4: #{tpu_custom_call.1} parent=1 // pred_region
      _
    $region5: #{tpu_custom_call.1} parent=1 // pred_fallthru
      _
    // Predicated region
    $region6: #{tpu_custom_call.1} parent=1 // pred_check
      _
    $region7: #{tpu_custom_call.1} parent=1 // pred_check_branch
      %13 = sbr.rel (0) target = $region9
    $region8: #{tpu_custom_call.1} parent=1 // pred_region
      _
    $region9: #{tpu_custom_call.1} parent=1 // pred_fallthru
      _
    // Predicated region
    $region10: #{tpu_custom_call.1} parent=1 // pred_check
      _
    $region11: #{tpu_custom_call.1} parent=1 // pred_check_branch
      %15 = sbr.rel (0) target = $region13
    $region12: #{tpu_custom_call.1} parent=1 // pred_region
      _
    $region13: #{tpu_custom_call.1} parent=1 // pred_fallthru
      _
    // Predicated region
    $region14: #{tpu_custom_call.1} parent=1 // pred_check
      _
    $region15: #{tpu_custom_call.1} parent=1 // pred_check_branch
      %17 = sbr.rel (0) target = $region17
    $region16: #{tpu_custom_call.1} parent=1 // pred_region
      _
    $region17: #{tpu_custom_call.1} parent=1 // pred_fallthru
      _
    %v18 = vld [vmem:[%s1] sm:$0xff]
    %v19 = vld [vmem:[%s1 + $0x8] sm:$0xff]
    %v20 = vld [vmem:[%s1 + $0x10] sm:$0xff]
    %v21 = vld [vmem:[%s1 + $0x18] sm:$0xff]
    %v22 = vld [vmem:[%s1 + $0x20] sm:$0xff]
    %v23 = vld [vmem:[%s1 + $0x28] sm:$0xff]
    %v24 = vld [vmem:[%s1 + $0x30] sm:$0xff]
    %v25 = vld [vmem:[%s1 + $0x38] sm:$0xff]
    %v26 = vld [vmem:[%s1 + $0x40] sm:$0xff]
    %v27 = vld [vmem:[%s1 + $0x48] sm:$0xff]
    %v28 = vld [vmem:[%s1 + $0x50] sm:$0xff]
    %v29 = vld [vmem:[%s1 + $0x58] sm:$0xff]
    %v30 = vld [vmem:[%s1 + $0x60] sm:$0xff]
    %v31 = vld [vmem:[%s1 + $0x68] sm:$0xff]
    %v32 = vld [vmem:[%s1 + $0x70] sm:$0xff]
    %v33 = vld [vmem:[%s1 + $0x78] sm:$0xff]
    %v34 = vld [vmem:[%s0] sm:$0xff]
    %v35 = vld [vmem:[%s0 + $0x8] sm:$0xff]
    %v36 = vld [vmem:[%s0 + $0x10] sm:$0xff]
    %v37 = vld [vmem:[%s0 + $0x18] sm:$0xff]
    %v38 = vld [vmem:[%s0 + $0x20] sm:$0xff]
    %v39 = vld [vmem:[%s0 + $0x28] sm:$0xff]
    %v40 = vld [vmem:[%s0 + $0x30] sm:$0xff]
    %v41 = vld [vmem:[%s0 + $0x38] sm:$0xff]
    %v42 = vld [vmem:[%s0 + $0x40] sm:$0xff]
    %v43 = vld [vmem:[%s0 + $0x48] sm:$0xff]
    %v44 = vld [vmem:[%s0 + $0x50] sm:$0xff]
    %v45 = vld [vmem:[%s0 + $0x58] sm:$0xff]
    %v46 = vld [vmem:[%s0 + $0x60] sm:$0xff]
    %v47 = vld [vmem:[%s0 + $0x68] sm:$0xff]
    %v48 = vld [vmem:[%s0 + $0x70] sm:$0xff]
    %v49 = vld [vmem:[%s0 + $0x78] sm:$0xff]
    %v50 = vld [vmem:[%s0 + $0x80] sm:$0xff]
    %v51 = vld [vmem:[%s0 + $0x88] sm:$0xff]
    %v52 = vld [vmem:[%s0 + $0x90] sm:$0xff]
    %v53 = vld [vmem:[%s0 + $0x98] sm:$0xff]
    %v54 = vld [vmem:[%s0 + $0xa0] sm:$0xff]
    %v55 = vld [vmem:[%s0 + $0xa8] sm:$0xff]
    %v56 = vld [vmem:[%s0 + $0xb0] sm:$0xff]
    %v57 = vld [vmem:[%s0 + $0xb8] sm:$0xff]
    %v58 = vld [vmem:[%s0 + $0xc0] sm:$0x7]
    %v59 = vld [vmem:[%s0 + $0xc8] sm:$0x7]
    %v60 = vld [vmem:[%s0 + $0xd0] sm:$0x7]
    %v61 = vld [vmem:[%s0 + $0xd8] sm:$0x7]
    %v62 = vld [vmem:[%s0 + $0xe0] sm:$0x7]
    %v63 = vld [vmem:[%s0 + $0xe8] sm:$0x7]
    %v64 = vld [vmem:[%s0 + $0xf0] sm:$0x7]
    %v65 = vld [vmem:[%s0 + $0xf8] sm:$0x7]
    %v66 = vld [vmem:[%s0 + $0x100] sm:$0xff]
    %v67 = vld [vmem:[%s0 + $0x108] sm:$0xff]
    %v68 = vld [vmem:[%s0 + $0x110] sm:$0xff]
    %v69 = vld [vmem:[%s0 + $0x118] sm:$0xff]
    %v70 = vld [vmem:[%s0 + $0x120] sm:$0xff]
    %v71 = vld [vmem:[%s0 + $0x128] sm:$0xff]
    %v72 = vld [vmem:[%s0 + $0x130] sm:$0xff]
    %v73 = vld [vmem:[%s0 + $0x138] sm:$0xff]
    %v74 = vld [vmem:[%s0 + $0x140] sm:$0xff]
    %v75 = vld [vmem:[%s0 + $0x148] sm:$0xff]
    %v76 = vld [vmem:[%s0 + $0x150] sm:$0xff]
    %v77 = vld [vmem:[%s0 + $0x158] sm:$0xff]
    %v78 = vld [vmem:[%s0 + $0x160] sm:$0xff]
    %v79 = vld [vmem:[%s0 + $0x168] sm:$0xff]
    %v80 = vld [vmem:[%s0 + $0x170] sm:$0xff]
    %v81 = vld [vmem:[%s0 + $0x178] sm:$0xff]
    %v82 = vld [vmem:[%s0 + $0x180] sm:$0xff]
    %v83 = vld [vmem:[%s0 + $0x188] sm:$0xff]
    %v84 = vld [vmem:[%s0 + $0x190] sm:$0xff]
    %v85 = vld [vmem:[%s0 + $0x198] sm:$0xff]
    %v86 = vld [vmem:[%s0 + $0x1a0] sm:$0xff]
    %v87 = vld [vmem:[%s0 + $0x1a8] sm:$0xff]
    %v88 = vld [vmem:[%s0 + $0x1b0] sm:$0xff]
    %v89 = vld [vmem:[%s0 + $0x1b8] sm:$0xff]
    %v90 = vld [vmem:[%s0 + $0x1c0] sm:$0x7]
    %v91 = vld [vmem:[%s0 + $0x1c8] sm:$0x7]
    %v92 = vld [vmem:[%s0 + $0x1d0] sm:$0x7]
    %v93 = vld [vmem:[%s0 + $0x1d8] sm:$0x7]
    %v94 = vld [vmem:[%s0 + $0x1e0] sm:$0x7]
    %v95 = vld [vmem:[%s0 + $0x1e8] sm:$0x7]
    %v96 = vld [vmem:[%s0 + $0x1f0] sm:$0x7]
    %v97 = vld [vmem:[%s0 + $0x1f8] sm:$0x7]
    %vm98 = vcmask 220160
    %v100 = vsel %vm98, %v18, 0
    %v103 = vsel %vm98, %v19, 0
    %v106 = vsel %vm98, %v20, 0
    %v109 = vsel %vm98, %v21, 0
    %v112 = vsel %vm98, %v22, 0
    %v115 = vsel %vm98, %v23, 0
    %v118 = vsel %vm98, %v24, 0
    %v121 = vsel %vm98, %v25, 0
    %vm123 = vcmask 1042432
    %v125 = vsel %vm123, %v58, 0
    %v128 = vsel %vm123, %v59, 0
    %v131 = vsel %vm123, %v60, 0
    %v134 = vsel %vm123, %v61, 0
    %v137 = vsel %vm123, %v62, 0
    %v140 = vsel %vm123, %v63, 0
    %v143 = vsel %vm123, %v64, 0
    %v146 = vsel %vm123, %v65, 0
    %148 = vmatprep.subr.mxu0 %v35
    %149 = vmatpush1.msra.mxu0 %v34
    %150 = vmatprep.subr.mxu0 %v43
    %151 = vmatpush1.msra.mxu0 %v42
    %152 = vmatprep.subr.mxu0 %v51
    %153 = vmatpush1.msra.mxu0 %v50
    %154 = vmatprep.subr.mxu0 %v128
    %155 = vmatpush1.msra.mxu0 %v125
    %156 = vmatprep.subr.mxu0 0.0
    %157 = vmatpush1.msra.mxu0 0.0
    %158 = vmatprep.subr.mxu0 0.0
    %159 = vmatpush1.msra.mxu0 0.0
    %160 = vmatprep.subr.mxu0 0.0
    %161 = vmatpush1.msra.mxu0 0.0
    %162 = vmatprep.subr.mxu0 0.0
    %163 = vmatpush1.msra.mxu0 0.0
    %164 = vmatprep.subr.mxu0 0.0
    %165 = vmatpush1.msra.mxu0 0.0
    %166 = vmatprep.subr.mxu0 0.0
    %167 = vmatpush1.msra.mxu0 0.0
    %168 = vmatprep.subr.mxu0 0.0
    %169 = vmatpush1.msra.mxu0 0.0
    %170 = vmatprep.subr.mxu0 0.0
    %171 = vmatpush1.msra.mxu0 0.0
    %172 = vmatprep.subr.mxu0 0.0
    %173 = vmatpush1.msra.mxu0 0.0
    %174 = vmatprep.subr.mxu0 0.0
    %175 = vmatpush1.msra.mxu0 0.0
    %176 = vmatprep.subr.mxu0 0.0
    %177 = vmatpush1.msra.mxu0 0.0
    %178 = vmatprep.subr.mxu0 0.0
    %179 = vmatpush1.msra.mxu0 0.0
    %180 = vmatprep.subr.mxu0 0.0
    %181 = vmatpush1.msra.mxu0 0.0
    %182 = vmatprep.subr.mxu0 0.0
    %183 = vmatpush1.msra.mxu0 0.0
    %184 = vmatprep.subr.mxu0 0.0
    %185 = vmatpush1.msra.mxu0 0.0
    %186 = vmatprep.subr.mxu0 0.0
    %187 = vmatpush1.msra.mxu0 0.0
    %188 = vmatprep.subr.mxu0 0.0
    %189 = vmatpush1.msra.mxu0 0.0
    %190 = vmatprep.subr.mxu0 0.0
    %191 = vmatpush1.msra.mxu0 0.0
    %192 = vmatprep.subr.mxu0 0.0
    %193 = vmatpush1.msra.mxu0 0.0
    %194 = vmatprep.subr.mxu0 0.0
    %195 = vmatpush1.msra.mxu0 0.0
    %196 = vmatprep.subr.mxu0 0.0
    %197 = vmatpush1.msra.mxu0 0.0
    %198 = vmatprep.subr.mxu0 0.0
    %199 = vmatpush1.msra.mxu0 0.0
    %200 = vmatprep.subr.mxu0 0.0
    %201 = vmatpush1.msra.mxu0 0.0
    %202 = vmatprep.subr.mxu0 0.0
    %203 = vmatpush1.msra.mxu0 0.0
    %204 = vmatprep.subr.mxu0 0.0
    %205 = vmatpush1.msra.mxu0 0.0
    %206 = vmatprep.subr.mxu0 0.0
    %207 = vmatpush1.msra.mxu0 0.0
    %208 = vmatprep.subr.mxu0 0.0
    %209 = vmatpush1.msra.mxu0 0.0
    %210 = vmatprep.subr.mxu0 0.0
    %211 = vmatpush1.msra.mxu0 0.0
    %212 = vmatprep.mubr.f32.mxu0 0.0
    %213 = vmatmul.mubr.f32.gmra.mrb[0].mxu0 %v100
    %v214 = vpop.f32.mrb[0].mxu0
    %v215 = vadd.f32 0.0, %v214
    %v216 = vpop.f32.mrb[0].mxu0
    %v217 = vadd.f32 0.0, %v216
    %218 = vmatprep.mubr.f32.mxu0 0.0
    %219 = vmatmul.mubr.f32.gmra.mrb[0].mxu0 %v103
    %v220 = vpop.f32.mrb[0].mxu0
    %v221 = vadd.f32 0.0, %v220
    %v222 = vpop.f32.mrb[0].mxu0
    %v223 = vadd.f32 0.0, %v222
    %224 = vmatprep.mubr.f32.mxu0 0.0
    %225 = vmatmul.mubr.f32.gmra.mrb[0].mxu0 %v106
    %v226 = vpop.f32.mrb[0].mxu0
    %v227 = vadd.f32 0.0, %v226
    %v228 = vpop.f32.mrb[0].mxu0
    %v229 = vadd.f32 0.0, %v228
    %230 = vmatprep.mubr.f32.mxu0 0.0
    %231 = vmatmul.mubr.f32.gmra.mrb[0].mxu0 %v109
    %v232 = vpop.f32.mrb[0].mxu0
    %v233 = vadd.f32 0.0, %v232
    %v234 = vpop.f32.mrb[0].mxu0
    %v235 = vadd.f32 0.0, %v234
    %236 = vmatprep.mubr.f32.mxu0 0.0
    %237 = vmatmul.mubr.f32.gmra.mrb[0].mxu0 %v112
    %v238 = vpop.f32.mrb[0].mxu0
    %v239 = vadd.f32 0.0, %v238
    %v240 = vpop.f32.mrb[0].mxu0
    %v241 = vadd.f32 0.0, %v240
    %242 = vmatprep.mubr.f32.mxu0 0.0
    %243 = vmatmul.mubr.f32.gmra.mrb[0].mxu0 %v115
    %v244 = vpop.f32.mrb[0].mxu0
    %v245 = vadd.f32 0.0, %v244
    %v246 = vpop.f32.mrb[0].mxu0
    %v247 = vadd.f32 0.0, %v246
    %248 = vmatprep.mubr.f32.mxu0 0.0
    %249 = vmatmul.mubr.f32.gmra.mrb[0].mxu0 %v118
    %v250 = vpop.f32.mrb[0].mxu0
    %v251 = vadd.f32 0.0, %v250
    %v252 = vpop.f32.mrb[0].mxu0
    %v253 = vadd.f32 0.0, %v252
    %254 = vmatprep.mubr.f32.mxu0 0.0
    %255 = vmatmul.mubr.f32.gmra.mrb[0].mxu0 %v121
    %v256 = vpop.f32.mrb[0].mxu0
    %v257 = vadd.f32 0.0, %v256
    %v258 = vpop.f32.mrb[0].mxu0
    %v259 = vadd.f32 0.0, %v258
    %260 = vdwg.mxu0
    %261 = vmatprep.subr.mxu0 %v37
    %262 = vmatpush1.msra.mxu0 %v36
    %263 = vmatprep.subr.mxu0 %v45
    %264 = vmatpush1.msra.mxu0 %v44
    %265 = vmatprep.subr.mxu0 %v53
    %266 = vmatpush1.msra.mxu0 %v52
    %267 = vmatprep.subr.mxu0 %v134
    %268 = vmatpush1.msra.mxu0 %v131
    %269 = vmatprep.subr.mxu0 0.0
    %270 = vmatpush1.msra.mxu0 0.0
    %271 = vmatprep.subr.mxu0 0.0
    %272 = vmatpush1.msra.mxu0 0.0
    %273 = vmatprep.subr.mxu0 0.0
    %274 = vmatpush1.msra.mxu0 0.0
    %275 = vmatprep.subr.mxu0 0.0
    %276 = vmatpush1.msra.mxu0 0.0
    %277 = vmatprep.subr.mxu0 0.0
    %278 = vmatpush1.msra.mxu0 0.0
    %279 = vmatprep.subr.mxu0 0.0
    %280 = vmatpush1.msra.mxu0 0.0
    %281 = vmatprep.subr.mxu0 0.0
    %282 = vmatpush1.msra.mxu0 0.0
    %283 = vmatprep.subr.mxu0 0.0
    %284 = vmatpush1.msra.mxu0 0.0
    %285 = vmatprep.subr.mxu0 0.0
    %286 = vmatpush1.msra.mxu0 0.0
    %287 = vmatprep.subr.mxu0 0.0
    %288 = vmatpush1.msra.mxu0 0.0
    %289 = vmatprep.subr.mxu0 0.0
    %290 = vmatpush1.msra.mxu0 0.0
    %291 = vmatprep.subr.mxu0 0.0
    %292 = vmatpush1.msra.mxu0 0.0
    %293 = vmatprep.subr.mxu0 0.0
    %294 = vmatpush1.msra.mxu0 0.0
    %295 = vmatprep.subr.mxu0 0.0
    %296 = vmatpush1.msra.mxu0 0.0
    %297 = vmatprep.subr.mxu0 0.0
    %298 = vmatpush1.msra.mxu0 0.0
    %299 = vmatprep.subr.mxu0 0.0
    %300 = vmatpush1.msra.mxu0 0.0
    %301 = vmatprep.subr.mxu0 0.0
    %302 = vmatpush1.msra.mxu0 0.0
    %303 = vmatprep.subr.mxu0 0.0
    %304 = vmatpush1.msra.mxu0 0.0
    %305 = vmatprep.subr.mxu0 0.0
    %306 = vmatpush1.msra.mxu0 0.0
    %307 = vmatprep.subr.mxu0 0.0
    %308 = vmatpush1.msra.mxu0 0.0
    %309 = vmatprep.subr.mxu0 0.0
    %310 = vmatpush1.msra.mxu0 0.0
    %311 = vmatprep.subr.mxu0 0.0
    %312 = vmatpush1.msra.mxu0 0.0
    %313 = vmatprep.subr.mxu0 0.0
    %314 = vmatpush1.msra.mxu0 0.0
    %315 = vmatprep.subr.mxu0 0.0
    %316 = vmatpush1.msra.mxu0 0.0
    %317 = vmatprep.subr.mxu0 0.0
    %318 = vmatpush1.msra.mxu0 0.0
    %319 = vmatprep.subr.mxu0 0.0
    %320 = vmatpush1.msra.mxu0 0.0
    %321 = vmatprep.subr.mxu0 0.0
    %322 = vmatpush1.msra.mxu0 0.0
    %323 = vmatprep.subr.mxu0 0.0
    %324 = vmatpush1.msra.mxu0 0.0
    %325 = vmatprep.mubr.f32.mxu0 0.0
    %326 = vmatmul.mubr.f32.gmra.mrb[0].mxu0 %v100
    %v327 = vpop.f32.mrb[0].mxu0
    %v328 = vadd.f32 0.0, %v327
    %v329 = vpop.f32.mrb[0].mxu0
    %v330 = vadd.f32 0.0, %v329
    %331 = vmatprep.mubr.f32.mxu0 0.0
    %332 = vmatmul.mubr.f32.gmra.mrb[0].mxu0 %v103
    %v333 = vpop.f32.mrb[0].mxu0
    %v334 = vadd.f32 0.0, %v333
    %v335 = vpop.f32.mrb[0].mxu0
    %v336 = vadd.f32 0.0, %v335
    %337 = vmatprep.mubr.f32.mxu0 0.0
    %338 = vmatmul.mubr.f32.gmra.mrb[0].mxu0 %v106
    %v339 = vpop.f32.mrb[0].mxu0
    %v340 = vadd.f32 0.0, %v339
    %v341 = vpop.f32.mrb[0].mxu0
    %v342 = vadd.f32 0.0, %v341
    %343 = vmatprep.mubr.f32.mxu0 0.0
    %344 = vmatmul.mubr.f32.gmra.mrb[0].mxu0 %v109
    %v345 = vpop.f32.mrb[0].mxu0
    %v346 = vadd.f32 0.0, %v345
    %v347 = vpop.f32.mrb[0].mxu0
    %v348 = vadd.f32 0.0, %v347
    %349 = vmatprep.mubr.f32.mxu0 0.0
    %350 = vmatmul.mubr.f32.gmra.mrb[0].mxu0 %v112
    %v351 = vpop.f32.mrb[0].mxu0
    %v352 = vadd.f32 0.0, %v351
    %v353 = vpop.f32.mrb[0].mxu0
    %v354 = vadd.f32 0.0, %v353
    %355 = vmatprep.mubr.f32.mxu0 0.0
    %356 = vmatmul.mubr.f32.gmra.mrb[0].mxu0 %v115
    %v357 = vpop.f32.mrb[0].mxu0
    %v358 = vadd.f32 0.0, %v357
    %v359 = vpop.f32.mrb[0].mxu0
    %v360 = vadd.f32 0.0, %v359
    %361 = vmatprep.mubr.f32.mxu0 0.0
    %362 = vmatmul.mubr.f32.gmra.mrb[0].mxu0 %v118
    %v363 = vpop.f32.mrb[0].mxu0
    %v364 = vadd.f32 0.0, %v363
    %v365 = vpop.f32.mrb[0].mxu0
    %v366 = vadd.f32 0.0, %v365
    %367 = vmatprep.mubr.f32.mxu0 0.0
    %368 = vmatmul.mubr.f32.gmra.mrb[0].mxu0 %v121
    %v369 = vpop.f32.mrb[0].mxu0
    %v370 = vadd.f32 0.0, %v369
    %v371 = vpop.f32.mrb[0].mxu0
    %v372 = vadd.f32 0.0, %v371
    %373 = vdwg.mxu0
    %374 = vmatprep.subr.mxu0 %v39
    %375 = vmatpush1.msra.mxu0 %v38
    %376 = vmatprep.subr.mxu0 %v47
    %377 = vmatpush1.msra.mxu0 %v46
    %378 = vmatprep.subr.mxu0 %v55
    %379 = vmatpush1.msra.mxu0 %v54
    %380 = vmatprep.subr.mxu0 %v140
    %381 = vmatpush1.msra.mxu0 %v137
    %382 = vmatprep.subr.mxu0 0.0
    %383 = vmatpush1.msra.mxu0 0.0
    %384 = vmatprep.subr.mxu0 0.0
    %385 = vmatpush1.msra.mxu0 0.0
    %386 = vmatprep.subr.mxu0 0.0
    %387 = vmatpush1.msra.mxu0 0.0
    %388 = vmatprep.subr.mxu0 0.0
    %389 = vmatpush1.msra.mxu0 0.0
    %390 = vmatprep.subr.mxu0 0.0
    %391 = vmatpush1.msra.mxu0 0.0
    %392 = vmatprep.subr.mxu0 0.0
    %393 = vmatpush1.msra.mxu0 0.0
    %394 = vmatprep.subr.mxu0 0.0
    %395 = vmatpush1.msra.mxu0 0.0
    %396 = vmatprep.subr.mxu0 0.0
    %397 = vmatpush1.msra.mxu0 0.0
    %398 = vmatprep.subr.mxu0 0.0
    %399 = vmatpush1.msra.mxu0 0.0
    %400 = vmatprep.subr.mxu0 0.0
    %401 = vmatpush1.msra.mxu0 0.0
    %402 = vmatprep.subr.mxu0 0.0
    %403 = vmatpush1.msra.mxu0 0.0
    %404 = vmatprep.subr.mxu0 0.0
    %405 = vmatpush1.msra.mxu0 0.0
    %406 = vmatprep.subr.mxu0 0.0
    %407 = vmatpush1.msra.mxu0 0.0
    %408 = vmatprep.subr.mxu0 0.0
    %409 = vmatpush1.msra.mxu0 0.0
    %410 = vmatprep.subr.mxu0 0.0
    %411 = vmatpush1.msra.mxu0 0.0
    %412 = vmatprep.subr.mxu0 0.0
    %413 = vmatpush1.msra.mxu0 0.0
    %414 = vmatprep.subr.mxu0 0.0
    %415 = vmatpush1.msra.mxu0 0.0
    %416 = vmatprep.subr.mxu0 0.0
    %417 = vmatpush1.msra.mxu0 0.0
    %418 = vmatprep.subr.mxu0 0.0
    %419 = vmatpush1.msra.mxu0 0.0
    %420 = vmatprep.subr.mxu0 0.0
    %421 = vmatpush1.msra.mxu0 0.0
    %422 = vmatprep.subr.mxu0 0.0
    %423 = vmatpush1.msra.mxu0 0.0
    %424 = vmatprep.subr.mxu0 0.0
    %425 = vmatpush1.msra.mxu0 0.0
    %426 = vmatprep.subr.mxu0 0.0
    %427 = vmatpush1.msra.mxu0 0.0
    %428 = vmatprep.subr.mxu0 0.0
    %429 = vmatpush1.msra.mxu0 0.0
    %430 = vmatprep.subr.mxu0 0.0
    %431 = vmatpush1.msra.mxu0 0.0
    %432 = vmatprep.subr.mxu0 0.0
    %433 = vmatpush1.msra.mxu0 0.0
    %434 = vmatprep.subr.mxu0 0.0
    %435 = vmatpush1.msra.mxu0 0.0
    %436 = vmatprep.subr.mxu0 0.0
    %437 = vmatpush1.msra.mxu0 0.0
    %438 = vmatprep.mubr.f32.mxu0 0.0
    %439 = vmatmul.mubr.f32.gmra.mrb[0].mxu0 %v100
    %v440 = vpop.f32.mrb[0].mxu0
    %v441 = vadd.f32 0.0, %v440
    %v442 = vpop.f32.mrb[0].mxu0
    %v443 = vadd.f32 0.0, %v442
    %444 = vmatprep.mubr.f32.mxu0 0.0
    %445 = vmatmul.mubr.f32.gmra.mrb[0].mxu0 %v103
    %v446 = vpop.f32.mrb[0].mxu0
    %v447 = vadd.f32 0.0, %v446
    %v448 = vpop.f32.mrb[0].mxu0
    %v449 = vadd.f32 0.0, %v448
    %450 = vmatprep.mubr.f32.mxu0 0.0
    %451 = vmatmul.mubr.f32.gmra.mrb[0].mxu0 %v106
    %v452 = vpop.f32.mrb[0].mxu0
    %v453 = vadd.f32 0.0, %v452
    %v454 = vpop.f32.mrb[0].mxu0
    %v455 = vadd.f32 0.0, %v454
    %456 = vmatprep.mubr.f32.mxu0 0.0
    %457 = vmatmul.mubr.f32.gmra.mrb[0].mxu0 %v109
    %v458 = vpop.f32.mrb[0].mxu0
    %v459 = vadd.f32 0.0, %v458
    %v460 = vpop.f32.mrb[0].mxu0
    %v461 = vadd.f32 0.0, %v460
    %462 = vmatprep.mubr.f32.mxu0 0.0
    %463 = vmatmul.mubr.f32.gmra.mrb[0].mxu0 %v112
    %v464 = vpop.f32.mrb[0].mxu0
    %v465 = vadd.f32 0.0, %v464
    %v466 = vpop.f32.mrb[0].mxu0
    %v467 = vadd.f32 0.0, %v466
    %468 = vmatprep.mubr.f32.mxu0 0.0
    %469 = vmatmul.mubr.f32.gmra.mrb[0].mxu0 %v115
    %v470 = vpop.f32.mrb[0].mxu0
    %v471 = vadd.f32 0.0, %v470
    %v472 = vpop.f32.mrb[0].mxu0
    %v473 = vadd.f32 0.0, %v472
    %474 = vmatprep.mubr.f32.mxu0 0.0
    %475 = vmatmul.mubr.f32.gmra.mrb[0].mxu0 %v118
    %v476 = vpop.f32.mrb[0].mxu0
    %v477 = vadd.f32 0.0, %v476
    %v478 = vpop.f32.mrb[0].mxu0
    %v479 = vadd.f32 0.0, %v478
    %480 = vmatprep.mubr.f32.mxu0 0.0
    %481 = vmatmul.mubr.f32.gmra.mrb[0].mxu0 %v121
    %v482 = vpop.f32.mrb[0].mxu0
    %v483 = vadd.f32 0.0, %v482
    %v484 = vpop.f32.mrb[0].mxu0
    %v485 = vadd.f32 0.0, %v484
    %486 = vdwg.mxu0
    %487 = vmatprep.subr.mxu0 %v41
    %488 = vmatpush1.msra.mxu0 %v40
    %489 = vmatprep.subr.mxu0 %v49
    %490 = vmatpush1.msra.mxu0 %v48
    %491 = vmatprep.subr.mxu0 %v57
    %492 = vmatpush1.msra.mxu0 %v56
    %493 = vmatprep.subr.mxu0 %v146
    %494 = vmatpush1.msra.mxu0 %v143
    %495 = vmatprep.subr.mxu0 0.0
    %496 = vmatpush1.msra.mxu0 0.0
    %497 = vmatprep.subr.mxu0 0.0
    %498 = vmatpush1.msra.mxu0 0.0
    %499 = vmatprep.subr.mxu0 0.0
    %500 = vmatpush1.msra.mxu0 0.0
    %501 = vmatprep.subr.mxu0 0.0
    %502 = vmatpush1.msra.mxu0 0.0
    %503 = vmatprep.subr.mxu0 0.0
    %504 = vmatpush1.msra.mxu0 0.0
    %505 = vmatprep.subr.mxu0 0.0
    %506 = vmatpush1.msra.mxu0 0.0
    %507 = vmatprep.subr.mxu0 0.0
    %508 = vmatpush1.msra.mxu0 0.0
    %509 = vmatprep.subr.mxu0 0.0
    %510 = vmatpush1.msra.mxu0 0.0
    %511 = vmatprep.subr.mxu0 0.0
    %512 = vmatpush1.msra.mxu0 0.0
    %513 = vmatprep.subr.mxu0 0.0
    %514 = vmatpush1.msra.mxu0 0.0
    %515 = vmatprep.subr.mxu0 0.0
    %516 = vmatpush1.msra.mxu0 0.0
    %517 = vmatprep.subr.mxu0 0.0
    %518 = vmatpush1.msra.mxu0 0.0
    %519 = vmatprep.subr.mxu0 0.0
    %520 = vmatpush1.msra.mxu0 0.0
    %521 = vmatprep.subr.mxu0 0.0
    %522 = vmatpush1.msra.mxu0 0.0
    %523 = vmatprep.subr.mxu0 0.0
    %524 = vmatpush1.msra.mxu0 0.0
    %525 = vmatprep.subr.mxu0 0.0
    %526 = vmatpush1.msra.mxu0 0.0
    %527 = vmatprep.subr.mxu0 0.0
    %528 = vmatpush1.msra.mxu0 0.0
    %529 = vmatprep.subr.mxu0 0.0
    %530 = vmatpush1.msra.mxu0 0.0
    %531 = vmatprep.subr.mxu0 0.0
    %532 = vmatpush1.msra.mxu0 0.0
    %533 = vmatprep.subr.mxu0 0.0
    %534 = vmatpush1.msra.mxu0 0.0
    %535 = vmatprep.subr.mxu0 0.0
    %536 = vmatpush1.msra.mxu0 0.0
    %537 = vmatprep.subr.mxu0 0.0
    %538 = vmatpush1.msra.mxu0 0.0
    %539 = vmatprep.subr.mxu0 0.0
    %540 = vmatpush1.msra.mxu0 0.0
    %541 = vmatprep.subr.mxu0 0.0
    %542 = vmatpush1.msra.mxu0 0.0
    %543 = vmatprep.subr.mxu0 0.0
    %544 = vmatpush1.msra.mxu0 0.0
    %545 = vmatprep.subr.mxu0 0.0
    %546 = vmatpush1.msra.mxu0 0.0
    %547 = vmatprep.subr.mxu0 0.0
    %548 = vmatpush1.msra.mxu0 0.0
    %549 = vmatprep.subr.mxu0 0.0
    %550 = vmatpush1.msra.mxu0 0.0
    %551 = vmatprep.mubr.f32.mxu0 0.0
    %552 = vmatmul.mubr.f32.gmra.mrb[0].mxu0 %v100
    %v553 = vpop.f32.mrb[0].mxu0
    %v554 = vadd.f32 0.0, %v553
    %v555 = vpop.f32.mrb[0].mxu0
    %v556 = vadd.f32 0.0, %v555
    %557 = vmatprep.mubr.f32.mxu0 0.0
    %558 = vmatmul.mubr.f32.gmra.mrb[0].mxu0 %v103
    %v559 = vpop.f32.mrb[0].mxu0
    %v560 = vadd.f32 0.0, %v559
    %v561 = vpop.f32.mrb[0].mxu0
    %v562 = vadd.f32 0.0, %v561
    %563 = vmatprep.mubr.f32.mxu0 0.0
    %564 = vmatmul.mubr.f32.gmra.mrb[0].mxu0 %v106
    %v565 = vpop.f32.mrb[0].mxu0
    %v566 = vadd.f32 0.0, %v565
    %v567 = vpop.f32.mrb[0].mxu0
    %v568 = vadd.f32 0.0, %v567
    %569 = vmatprep.mubr.f32.mxu0 0.0
    %570 = vmatmul.mubr.f32.gmra.mrb[0].mxu0 %v109
    %v571 = vpop.f32.mrb[0].mxu0
    %v572 = vadd.f32 0.0, %v571
    %v573 = vpop.f32.mrb[0].mxu0
    %v574 = vadd.f32 0.0, %v573
    %575 = vmatprep.mubr.f32.mxu0 0.0
    %576 = vmatmul.mubr.f32.gmra.mrb[0].mxu0 %v112
    %v577 = vpop.f32.mrb[0].mxu0
    %v578 = vadd.f32 0.0, %v577
    %v579 = vpop.f32.mrb[0].mxu0
    %v580 = vadd.f32 0.0, %v579
    %581 = vmatprep.mubr.f32.mxu0 0.0
    %582 = vmatmul.mubr.f32.gmra.mrb[0].mxu0 %v115
    %v583 = vpop.f32.mrb[0].mxu0
    %v584 = vadd.f32 0.0, %v583
    %v585 = vpop.f32.mrb[0].mxu0
    %v586 = vadd.f32 0.0, %v585
    %587 = vmatprep.mubr.f32.mxu0 0.0
    %588 = vmatmul.mubr.f32.gmra.mrb[0].mxu0 %v118
    %v589 = vpop.f32.mrb[0].mxu0
    %v590 = vadd.f32 0.0, %v589
    %v591 = vpop.f32.mrb[0].mxu0
    %v592 = vadd.f32 0.0, %v591
    %593 = vmatprep.mubr.f32.mxu0 0.0
    %594 = vmatmul.mubr.f32.gmra.mrb[0].mxu0 %v121
    %v595 = vpop.f32.mrb[0].mxu0
    %v596 = vadd.f32 0.0, %v595
    %v597 = vpop.f32.mrb[0].mxu0
    %v598 = vadd.f32 0.0, %v597
    %599 = vdwg.mxu0
    %v601 = vsel %vm98, %v26, 0
    %v604 = vsel %vm98, %v27, 0
    %v607 = vsel %vm98, %v28, 0
    %v610 = vsel %vm98, %v29, 0
    %v613 = vsel %vm98, %v30, 0
    %v616 = vsel %vm98, %v31, 0
    %v619 = vsel %vm98, %v32, 0
    %v622 = vsel %vm98, %v33, 0
    %v625 = vsel %vm123, %v90, 0
    %v628 = vsel %vm123, %v91, 0
    %v631 = vsel %vm123, %v92, 0
    %v634 = vsel %vm123, %v93, 0
    %v637 = vsel %vm123, %v94, 0
    %v640 = vsel %vm123, %v95, 0
    %v643 = vsel %vm123, %v96, 0
    %v646 = vsel %vm123, %v97, 0
    %648 = vmatprep.subr.mxu0 %v67
    %649 = vmatpush1.msra.mxu0 %v66
    %650 = vmatprep.subr.mxu0 %v75
    %651 = vmatpush1.msra.mxu0 %v74
    %652 = vmatprep.subr.mxu0 %v83
    %653 = vmatpush1.msra.mxu0 %v82
    %654 = vmatprep.subr.mxu0 %v628
    %655 = vmatpush1.msra.mxu0 %v625
    %656 = vmatprep.subr.mxu0 0.0
    %657 = vmatpush1.msra.mxu0 0.0
    %658 = vmatprep.subr.mxu0 0.0
    %659 = vmatpush1.msra.mxu0 0.0
    %660 = vmatprep.subr.mxu0 0.0
    %661 = vmatpush1.msra.mxu0 0.0
    %662 = vmatprep.subr.mxu0 0.0
    %663 = vmatpush1.msra.mxu0 0.0
    %664 = vmatprep.subr.mxu0 0.0
    %665 = vmatpush1.msra.mxu0 0.0
    %666 = vmatprep.subr.mxu0 0.0
    %667 = vmatpush1.msra.mxu0 0.0
    %668 = vmatprep.subr.mxu0 0.0
    %669 = vmatpush1.msra.mxu0 0.0
    %670 = vmatprep.subr.mxu0 0.0
    %671 = vmatpush1.msra.mxu0 0.0
    %672 = vmatprep.subr.mxu0 0.0
    %673 = vmatpush1.msra.mxu0 0.0
    %674 = vmatprep.subr.mxu0 0.0
    %675 = vmatpush1.msra.mxu0 0.0
    %676 = vmatprep.subr.mxu0 0.0
    %677 = vmatpush1.msra.mxu0 0.0
    %678 = vmatprep.subr.mxu0 0.0
    %679 = vmatpush1.msra.mxu0 0.0
    %680 = vmatprep.subr.mxu0 0.0
    %681 = vmatpush1.msra.mxu0 0.0
    %682 = vmatprep.subr.mxu0 0.0
    %683 = vmatpush1.msra.mxu0 0.0
    %684 = vmatprep.subr.mxu0 0.0
    %685 = vmatpush1.msra.mxu0 0.0
    %686 = vmatprep.subr.mxu0 0.0
    %687 = vmatpush1.msra.mxu0 0.0
    %688 = vmatprep.subr.mxu0 0.0
    %689 = vmatpush1.msra.mxu0 0.0
    %690 = vmatprep.subr.mxu0 0.0
    %691 = vmatpush1.msra.mxu0 0.0
    %692 = vmatprep.subr.mxu0 0.0
    %693 = vmatpush1.msra.mxu0 0.0
    %694 = vmatprep.subr.mxu0 0.0
    %695 = vmatpush1.msra.mxu0 0.0
    %696 = vmatprep.subr.mxu0 0.0
    %697 = vmatpush1.msra.mxu0 0.0
    %698 = vmatprep.subr.mxu0 0.0
    %699 = vmatpush1.msra.mxu0 0.0
    %700 = vmatprep.subr.mxu0 0.0
    %701 = vmatpush1.msra.mxu0 0.0
    %702 = vmatprep.subr.mxu0 0.0
    %703 = vmatpush1.msra.mxu0 0.0
    %704 = vmatprep.subr.mxu0 0.0
    %705 = vmatpush1.msra.mxu0 0.0
    %706 = vmatprep.subr.mxu0 0.0
    %707 = vmatpush1.msra.mxu0 0.0
    %708 = vmatprep.subr.mxu0 0.0
    %709 = vmatpush1.msra.mxu0 0.0
    %710 = vmatprep.subr.mxu0 0.0
    %711 = vmatpush1.msra.mxu0 0.0
    %712 = vmatprep.mubr.f32.mxu0 0.0
    %713 = vmatmul.mubr.f32.gmra.mrb[0].mxu0 %v601
    %v714 = vpop.f32.mrb[0].mxu0
    %v715 = vadd.f32 0.0, %v714
    %v716 = vpop.f32.mrb[0].mxu0
    %v717 = vadd.f32 0.0, %v716
    %718 = vmatprep.mubr.f32.mxu0 0.0
    %719 = vmatmul.mubr.f32.gmra.mrb[0].mxu0 %v604
    %v720 = vpop.f32.mrb[0].mxu0
    %v721 = vadd.f32 0.0, %v720
    %v722 = vpop.f32.mrb[0].mxu0
    %v723 = vadd.f32 0.0, %v722
    %724 = vmatprep.mubr.f32.mxu0 0.0
    %725 = vmatmul.mubr.f32.gmra.mrb[0].mxu0 %v607
    %v726 = vpop.f32.mrb[0].mxu0
    %v727 = vadd.f32 0.0, %v726
    %v728 = vpop.f32.mrb[0].mxu0
    %v729 = vadd.f32 0.0, %v728
    %730 = vmatprep.mubr.f32.mxu0 0.0
    %731 = vmatmul.mubr.f32.gmra.mrb[0].mxu0 %v610
    %v732 = vpop.f32.mrb[0].mxu0
    %v733 = vadd.f32 0.0, %v732
    %v734 = vpop.f32.mrb[0].mxu0
    %v735 = vadd.f32 0.0, %v734
    %736 = vmatprep.mubr.f32.mxu0 0.0
    %737 = vmatmul.mubr.f32.gmra.mrb[0].mxu0 %v613
    %v738 = vpop.f32.mrb[0].mxu0
    %v739 = vadd.f32 0.0, %v738
    %v740 = vpop.f32.mrb[0].mxu0
    %v741 = vadd.f32 0.0, %v740
    %742 = vmatprep.mubr.f32.mxu0 0.0
    %743 = vmatmul.mubr.f32.gmra.mrb[0].mxu0 %v616
    %v744 = vpop.f32.mrb[0].mxu0
    %v745 = vadd.f32 0.0, %v744
    %v746 = vpop.f32.mrb[0].mxu0
    %v747 = vadd.f32 0.0, %v746
    %748 = vmatprep.mubr.f32.mxu0 0.0
    %749 = vmatmul.mubr.f32.gmra.mrb[0].mxu0 %v619
    %v750 = vpop.f32.mrb[0].mxu0
    %v751 = vadd.f32 0.0, %v750
    %v752 = vpop.f32.mrb[0].mxu0
    %v753 = vadd.f32 0.0, %v752
    %754 = vmatprep.mubr.f32.mxu0 0.0
    %755 = vmatmul.mubr.f32.gmra.mrb[0].mxu0 %v622
    %v756 = vpop.f32.mrb[0].mxu0
    %v757 = vadd.f32 0.0, %v756
    %v758 = vpop.f32.mrb[0].mxu0
    %v759 = vadd.f32 0.0, %v758
    %760 = vdwg.mxu0
    %761 = vmatprep.subr.mxu0 %v69
    %762 = vmatpush1.msra.mxu0 %v68
    %763 = vmatprep.subr.mxu0 %v77
    %764 = vmatpush1.msra.mxu0 %v76
    %765 = vmatprep.subr.mxu0 %v85
    %766 = vmatpush1.msra.mxu0 %v84
    %767 = vmatprep.subr.mxu0 %v634
    %768 = vmatpush1.msra.mxu0 %v631
    %769 = vmatprep.subr.mxu0 0.0
    %770 = vmatpush1.msra.mxu0 0.0
    %771 = vmatprep.subr.mxu0 0.0
    %772 = vmatpush1.msra.mxu0 0.0
    %773 = vmatprep.subr.mxu0 0.0
    %774 = vmatpush1.msra.mxu0 0.0
    %775 = vmatprep.subr.mxu0 0.0
    %776 = vmatpush1.msra.mxu0 0.0
    %777 = vmatprep.subr.mxu0 0.0
    %778 = vmatpush1.msra.mxu0 0.0
    %779 = vmatprep.subr.mxu0 0.0
    %780 = vmatpush1.msra.mxu0 0.0
    %781 = vmatprep.subr.mxu0 0.0
    %782 = vmatpush1.msra.mxu0 0.0
    %783 = vmatprep.subr.mxu0 0.0
    %784 = vmatpush1.msra.mxu0 0.0
    %785 = vmatprep.subr.mxu0 0.0
    %786 = vmatpush1.msra.mxu0 0.0
    %787 = vmatprep.subr.mxu0 0.0
    %788 = vmatpush1.msra.mxu0 0.0
    %789 = vmatprep.subr.mxu0 0.0
    %790 = vmatpush1.msra.mxu0 0.0
    %791 = vmatprep.subr.mxu0 0.0
    %792 = vmatpush1.msra.mxu0 0.0
    %793 = vmatprep.subr.mxu0 0.0
    %794 = vmatpush1.msra.mxu0 0.0
    %795 = vmatprep.subr.mxu0 0.0
    %796 = vmatpush1.msra.mxu0 0.0
    %797 = vmatprep.subr.mxu0 0.0
    %798 = vmatpush1.msra.mxu0 0.0
    %799 = vmatprep.subr.mxu0 0.0
    %800 = vmatpush1.msra.mxu0 0.0
    %801 = vmatprep.subr.mxu0 0.0
    %802 = vmatpush1.msra.mxu0 0.0
    %803 = vmatprep.subr.mxu0 0.0
    %804 = vmatpush1.msra.mxu0 0.0
    %805 = vmatprep.subr.mxu0 0.0
    %806 = vmatpush1.msra.mxu0 0.0
    %807 = vmatprep.subr.mxu0 0.0
    %808 = vmatpush1.msra.mxu0 0.0
    %809 = vmatprep.subr.mxu0 0.0
    %810 = vmatpush1.msra.mxu0 0.0
    %811 = vmatprep.subr.mxu0 0.0
    %812 = vmatpush1.msra.mxu0 0.0
    %813 = vmatprep.subr.mxu0 0.0
    %814 = vmatpush1.msra.mxu0 0.0
    %815 = vmatprep.subr.mxu0 0.0
    %816 = vmatpush1.msra.mxu0 0.0
    %817 = vmatprep.subr.mxu0 0.0
    %818 = vmatpush1.msra.mxu0 0.0
    %819 = vmatprep.subr.mxu0 0.0
    %820 = vmatpush1.msra.mxu0 0.0
    %821 = vmatprep.subr.mxu0 0.0
    %822 = vmatpush1.msra.mxu0 0.0
    %823 = vmatprep.subr.mxu0 0.0
    %824 = vmatpush1.msra.mxu0 0.0
    %825 = vmatprep.mubr.f32.mxu0 0.0
    %826 = vmatmul.mubr.f32.gmra.mrb[0].mxu0 %v601
    %v827 = vpop.f32.mrb[0].mxu0
    %v828 = vadd.f32 0.0, %v827
    %v829 = vpop.f32.mrb[0].mxu0
    %v830 = vadd.f32 0.0, %v829
    %831 = vmatprep.mubr.f32.mxu0 0.0
    %832 = vmatmul.mubr.f32.gmra.mrb[0].mxu0 %v604
    %v833 = vpop.f32.mrb[0].mxu0
    %v834 = vadd.f32 0.0, %v833
    %v835 = vpop.f32.mrb[0].mxu0
    %v836 = vadd.f32 0.0, %v835
    %837 = vmatprep.mubr.f32.mxu0 0.0
    %838 = vmatmul.mubr.f32.gmra.mrb[0].mxu0 %v607
    %v839 = vpop.f32.mrb[0].mxu0
    %v840 = vadd.f32 0.0, %v839
    %v841 = vpop.f32.mrb[0].mxu0
    %v842 = vadd.f32 0.0, %v841
    %843 = vmatprep.mubr.f32.mxu0 0.0
    %844 = vmatmul.mubr.f32.gmra.mrb[0].mxu0 %v610
    %v845 = vpop.f32.mrb[0].mxu0
    %v846 = vadd.f32 0.0, %v845
    %v847 = vpop.f32.mrb[0].mxu0
    %v848 = vadd.f32 0.0, %v847
    %849 = vmatprep.mubr.f32.mxu0 0.0
    %850 = vmatmul.mubr.f32.gmra.mrb[0].mxu0 %v613
    %v851 = vpop.f32.mrb[0].mxu0
    %v852 = vadd.f32 0.0, %v851
    %v853 = vpop.f32.mrb[0].mxu0
    %v854 = vadd.f32 0.0, %v853
    %855 = vmatprep.mubr.f32.mxu0 0.0
    %856 = vmatmul.mubr.f32.gmra.mrb[0].mxu0 %v616
    %v857 = vpop.f32.mrb[0].mxu0
    %v858 = vadd.f32 0.0, %v857
    %v859 = vpop.f32.mrb[0].mxu0
    %v860 = vadd.f32 0.0, %v859
    %861 = vmatprep.mubr.f32.mxu0 0.0
    %862 = vmatmul.mubr.f32.gmra.mrb[0].mxu0 %v619
    %v863 = vpop.f32.mrb[0].mxu0
    %v864 = vadd.f32 0.0, %v863
    %v865 = vpop.f32.mrb[0].mxu0
    %v866 = vadd.f32 0.0, %v865
    %867 = vmatprep.mubr.f32.mxu0 0.0
    %868 = vmatmul.mubr.f32.gmra.mrb[0].mxu0 %v622
    %v869 = vpop.f32.mrb[0].mxu0
    %v870 = vadd.f32 0.0, %v869
    %v871 = vpop.f32.mrb[0].mxu0
    %v872 = vadd.f32 0.0, %v871
    %873 = vdwg.mxu0
    %874 = vmatprep.subr.mxu0 %v71
    %875 = vmatpush1.msra.mxu0 %v70
    %876 = vmatprep.subr.mxu0 %v79
    %877 = vmatpush1.msra.mxu0 %v78
    %878 = vmatprep.subr.mxu0 %v87
    %879 = vmatpush1.msra.mxu0 %v86
    %880 = vmatprep.subr.mxu0 %v640
    %881 = vmatpush1.msra.mxu0 %v637
    %882 = vmatprep.subr.mxu0 0.0
    %883 = vmatpush1.msra.mxu0 0.0
    %884 = vmatprep.subr.mxu0 0.0
    %885 = vmatpush1.msra.mxu0 0.0
    %886 = vmatprep.subr.mxu0 0.0
    %887 = vmatpush1.msra.mxu0 0.0
    %888 = vmatprep.subr.mxu0 0.0
    %889 = vmatpush1.msra.mxu0 0.0
    %890 = vmatprep.subr.mxu0 0.0
    %891 = vmatpush1.msra.mxu0 0.0
    %892 = vmatprep.subr.mxu0 0.0
    %893 = vmatpush1.msra.mxu0 0.0
    %894 = vmatprep.subr.mxu0 0.0
    %895 = vmatpush1.msra.mxu0 0.0
    %896 = vmatprep.subr.mxu0 0.0
    %897 = vmatpush1.msra.mxu0 0.0
    %898 = vmatprep.subr.mxu0 0.0
    %899 = vmatpush1.msra.mxu0 0.0
    %900 = vmatprep.subr.mxu0 0.0
    %901 = vmatpush1.msra.mxu0 0.0
    %902 = vmatprep.subr.mxu0 0.0
    %903 = vmatpush1.msra.mxu0 0.0
    %904 = vmatprep.subr.mxu0 0.0
    %905 = vmatpush1.msra.mxu0 0.0
    %906 = vmatprep.subr.mxu0 0.0
    %907 = vmatpush1.msra.mxu0 0.0
    %908 = vmatprep.subr.mxu0 0.0
    %909 = vmatpush1.msra.mxu0 0.0
    %910 = vmatprep.subr.mxu0 0.0
    %911 = vmatpush1.msra.mxu0 0.0
    %912 = vmatprep.subr.mxu0 0.0
    %913 = vmatpush1.msra.mxu0 0.0
    %914 = vmatprep.subr.mxu0 0.0
    %915 = vmatpush1.msra.mxu0 0.0
    %916 = vmatprep.subr.mxu0 0.0
    %917 = vmatpush1.msra.mxu0 0.0
    %918 = vmatprep.subr.mxu0 0.0
    %919 = vmatpush1.msra.mxu0 0.0
    %920 = vmatprep.subr.mxu0 0.0
    %921 = vmatpush1.msra.mxu0 0.0
    %922 = vmatprep.subr.mxu0 0.0
    %923 = vmatpush1.msra.mxu0 0.0
    %924 = vmatprep.subr.mxu0 0.0
    %925 = vmatpush1.msra.mxu0 0.0
    %926 = vmatprep.subr.mxu0 0.0
    %927 = vmatpush1.msra.mxu0 0.0
    %928 = vmatprep.subr.mxu0 0.0
    %929 = vmatpush1.msra.mxu0 0.0
    %930 = vmatprep.subr.mxu0 0.0
    %931 = vmatpush1.msra.mxu0 0.0
    %932 = vmatprep.subr.mxu0 0.0
    %933 = vmatpush1.msra.mxu0 0.0
    %934 = vmatprep.subr.mxu0 0.0
    %935 = vmatpush1.msra.mxu0 0.0
    %936 = vmatprep.subr.mxu0 0.0
    %937 = vmatpush1.msra.mxu0 0.0
    %938 = vmatprep.mubr.f32.mxu0 0.0
    %939 = vmatmul.mubr.f32.gmra.mrb[0].mxu0 %v601
    %v940 = vpop.f32.mrb[0].mxu0
    %v941 = vadd.f32 0.0, %v940
    %v942 = vpop.f32.mrb[0].mxu0
    %v943 = vadd.f32 0.0, %v942
    %944 = vmatprep.mubr.f32.mxu0 0.0
    %945 = vmatmul.mubr.f32.gmra.mrb[0].mxu0 %v604
    %v946 = vpop.f32.mrb[0].mxu0
    %v947 = vadd.f32 0.0, %v946
    %v948 = vpop.f32.mrb[0].mxu0
    %v949 = vadd.f32 0.0, %v948
    %950 = vmatprep.mubr.f32.mxu0 0.0
    %951 = vmatmul.mubr.f32.gmra.mrb[0].mxu0 %v607
    %v952 = vpop.f32.mrb[0].mxu0
    %v953 = vadd.f32 0.0, %v952
    %v954 = vpop.f32.mrb[0].mxu0
    %v955 = vadd.f32 0.0, %v954
    %956 = vmatprep.mubr.f32.mxu0 0.0
    %957 = vmatmul.mubr.f32.gmra.mrb[0].mxu0 %v610
    %v958 = vpop.f32.mrb[0].mxu0
    %v959 = vadd.f32 0.0, %v958
    %v960 = vpop.f32.mrb[0].mxu0
    %v961 = vadd.f32 0.0, %v960
    %962 = vmatprep.mubr.f32.mxu0 0.0
    %963 = vmatmul.mubr.f32.gmra.mrb[0].mxu0 %v613
    %v964 = vpop.f32.mrb[0].mxu0
    %v965 = vadd.f32 0.0, %v964
    %v966 = vpop.f32.mrb[0].mxu0
    %v967 = vadd.f32 0.0, %v966
    %968 = vmatprep.mubr.f32.mxu0 0.0
    %969 = vmatmul.mubr.f32.gmra.mrb[0].mxu0 %v616
    %v970 = vpop.f32.mrb[0].mxu0
    %v971 = vadd.f32 0.0, %v970
    %v972 = vpop.f32.mrb[0].mxu0
    %v973 = vadd.f32 0.0, %v972
    %974 = vmatprep.mubr.f32.mxu0 0.0
    %975 = vmatmul.mubr.f32.gmra.mrb[0].mxu0 %v619
    %v976 = vpop.f32.mrb[0].mxu0
    %v977 = vadd.f32 0.0, %v976
    %v978 = vpop.f32.mrb[0].mxu0
    %v979 = vadd.f32 0.0, %v978
    %980 = vmatprep.mubr.f32.mxu0 0.0
    %981 = vmatmul.mubr.f32.gmra.mrb[0].mxu0 %v622
    %v982 = vpop.f32.mrb[0].mxu0
    %v983 = vadd.f32 0.0, %v982
    %v984 = vpop.f32.mrb[0].mxu0
    %v985 = vadd.f32 0.0, %v984
    %986 = vdwg.mxu0
    %987 = vmatprep.subr.mxu0 %v73
    %988 = vmatpush1.msra.mxu0 %v72
    %989 = vmatprep.subr.mxu0 %v81
    %990 = vmatpush1.msra.mxu0 %v80
    %991 = vmatprep.subr.mxu0 %v89
    %992 = vmatpush1.msra.mxu0 %v88
    %993 = vmatprep.subr.mxu0 %v646
    %994 = vmatpush1.msra.mxu0 %v643
    %995 = vmatprep.subr.mxu0 0.0
    %996 = vmatpush1.msra.mxu0 0.0
    %997 = vmatprep.subr.mxu0 0.0
    %998 = vmatpush1.msra.mxu0 0.0
    %999 = vmatprep.subr.mxu0 0.0
    %1000 = vmatpush1.msra.mxu0 0.0
    %1001 = vmatprep.subr.mxu0 0.0
    %1002 = vmatpush1.msra.mxu0 0.0
    %1003 = vmatprep.subr.mxu0 0.0
    %1004 = vmatpush1.msra.mxu0 0.0
    %1005 = vmatprep.subr.mxu0 0.0
    %1006 = vmatpush1.msra.mxu0 0.0
    %1007 = vmatprep.subr.mxu0 0.0
    %1008 = vmatpush1.msra.mxu0 0.0
    %1009 = vmatprep.subr.mxu0 0.0
    %1010 = vmatpush1.msra.mxu0 0.0
    %1011 = vmatprep.subr.mxu0 0.0
    %1012 = vmatpush1.msra.mxu0 0.0
    %1013 = vmatprep.subr.mxu0 0.0
    %1014 = vmatpush1.msra.mxu0 0.0
    %1015 = vmatprep.subr.mxu0 0.0
    %1016 = vmatpush1.msra.mxu0 0.0
    %1017 = vmatprep.subr.mxu0 0.0
    %1018 = vmatpush1.msra.mxu0 0.0
    %1019 = vmatprep.subr.mxu0 0.0
    %1020 = vmatpush1.msra.mxu0 0.0
    %1021 = vmatprep.subr.mxu0 0.0
    %1022 = vmatpush1.msra.mxu0 0.0
    %1023 = vmatprep.subr.mxu0 0.0
    %1024 = vmatpush1.msra.mxu0 0.0
    %1025 = vmatprep.subr.mxu0 0.0
    %1026 = vmatpush1.msra.mxu0 0.0
    %1027 = vmatprep.subr.mxu0 0.0
    %1028 = vmatpush1.msra.mxu0 0.0
    %1029 = vmatprep.subr.mxu0 0.0
    %1030 = vmatpush1.msra.mxu0 0.0
    %1031 = vmatprep.subr.mxu0 0.0
    %1032 = vmatpush1.msra.mxu0 0.0
    %1033 = vmatprep.subr.mxu0 0.0
    %1034 = vmatpush1.msra.mxu0 0.0
    %1035 = vmatprep.subr.mxu0 0.0
    %1036 = vmatpush1.msra.mxu0 0.0
    %1037 = vmatprep.subr.mxu0 0.0
    %1038 = vmatpush1.msra.mxu0 0.0
    %1039 = vmatprep.subr.mxu0 0.0
    %1040 = vmatpush1.msra.mxu0 0.0
    %1041 = vmatprep.subr.mxu0 0.0
    %1042 = vmatpush1.msra.mxu0 0.0
    %1043 = vmatprep.subr.mxu0 0.0
    %1044 = vmatpush1.msra.mxu0 0.0
    %1045 = vmatprep.subr.mxu0 0.0
    %1046 = vmatpush1.msra.mxu0 0.0
    %1047 = vmatprep.subr.mxu0 0.0
    %1048 = vmatpush1.msra.mxu0 0.0
    %1049 = vmatprep.subr.mxu0 0.0
    %1050 = vmatpush1.msra.mxu0 0.0
    %1051 = vmatprep.mubr.f32.mxu0 0.0
    %1052 = vmatmul.mubr.f32.gmra.mrb[0].mxu0 %v601
    %v1053 = vpop.f32.mrb[0].mxu0
    %v1054 = vadd.f32 0.0, %v1053
    %v1055 = vpop.f32.mrb[0].mxu0
    %v1056 = vadd.f32 0.0, %v1055
    %1057 = vmatprep.mubr.f32.mxu0 0.0
    %1058 = vmatmul.mubr.f32.gmra.mrb[0].mxu0 %v604
    %v1059 = vpop.f32.mrb[0].mxu0
    %v1060 = vadd.f32 0.0, %v1059
    %v1061 = vpop.f32.mrb[0].mxu0
    %v1062 = vadd.f32 0.0, %v1061
    %1063 = vmatprep.mubr.f32.mxu0 0.0
    %1064 = vmatmul.mubr.f32.gmra.mrb[0].mxu0 %v607
    %v1065 = vpop.f32.mrb[0].mxu0
    %v1066 = vadd.f32 0.0, %v1065
    %v1067 = vpop.f32.mrb[0].mxu0
    %v1068 = vadd.f32 0.0, %v1067
    %1069 = vmatprep.mubr.f32.mxu0 0.0
    %1070 = vmatmul.mubr.f32.gmra.mrb[0].mxu0 %v610
    %v1071 = vpop.f32.mrb[0].mxu0
    %v1072 = vadd.f32 0.0, %v1071
    %v1073 = vpop.f32.mrb[0].mxu0
    %v1074 = vadd.f32 0.0, %v1073
    %1075 = vmatprep.mubr.f32.mxu0 0.0
    %1076 = vmatmul.mubr.f32.gmra.mrb[0].mxu0 %v613
    %v1077 = vpop.f32.mrb[0].mxu0
    %v1078 = vadd.f32 0.0, %v1077
    %v1079 = vpop.f32.mrb[0].mxu0
    %v1080 = vadd.f32 0.0, %v1079
    %1081 = vmatprep.mubr.f32.mxu0 0.0
    %1082 = vmatmul.mubr.f32.gmra.mrb[0].mxu0 %v616
    %v1083 = vpop.f32.mrb[0].mxu0
    %v1084 = vadd.f32 0.0, %v1083
    %v1085 = vpop.f32.mrb[0].mxu0
    %v1086 = vadd.f32 0.0, %v1085
    %1087 = vmatprep.mubr.f32.mxu0 0.0
    %1088 = vmatmul.mubr.f32.gmra.mrb[0].mxu0 %v619
    %v1089 = vpop.f32.mrb[0].mxu0
    %v1090 = vadd.f32 0.0, %v1089
    %v1091 = vpop.f32.mrb[0].mxu0
    %v1092 = vadd.f32 0.0, %v1091
    %1093 = vmatprep.mubr.f32.mxu0 0.0
    %1094 = vmatmul.mubr.f32.gmra.mrb[0].mxu0 %v622
    %v1095 = vpop.f32.mrb[0].mxu0
    %v1096 = vadd.f32 0.0, %v1095
    %v1097 = vpop.f32.mrb[0].mxu0
    %v1098 = vadd.f32 0.0, %v1097
    %1099 = vdwg.mxu0
    %v1100 = vld [vmem:[%s2] sm:$0xff]
    %v1101 = vld [vmem:[%s2 + $0x8] sm:$0xff]
    %v1102 = vld [vmem:[%s2 + $0x10] sm:$0xff]
    %v1103 = vld [vmem:[%s2 + $0x18] sm:$0xff]
    %v1104 = vld [vmem:[%s2 + $0x20] sm:$0xff]
    %v1105 = vld [vmem:[%s2 + $0x28] sm:$0xff]
    %v1106 = vld [vmem:[%s2 + $0x30] sm:$0xff]
    %v1107 = vld [vmem:[%s2 + $0x38] sm:$0xff]
    %1109 = vset.pattern.permute.xlu0 0
    %1110 = vperm.xlu0 %1109, %v1100
    %v1111 = vpop.permute.xlu0 %1110
    %1114 = vset.pattern.permute.xlu0 0
    %1115 = vperm.xlu0 %1114, %v1101
    %v1116 = vpop.permute.xlu0 %1115
    %1119 = vset.pattern.permute.xlu0 0
    %1120 = vperm.xlu0 %1119, %v1102
    %v1121 = vpop.permute.xlu0 %1120
    %1124 = vset.pattern.permute.xlu0 0
    %1125 = vperm.xlu0 %1124, %v1103
    %v1126 = vpop.permute.xlu0 %1125
    %1129 = vset.pattern.permute.xlu0 0
    %1130 = vperm.xlu0 %1129, %v1104
    %v1131 = vpop.permute.xlu0 %1130
    %1134 = vset.pattern.permute.xlu0 0
    %1135 = vperm.xlu0 %1134, %v1105
    %v1136 = vpop.permute.xlu0 %1135
    %1139 = vset.pattern.permute.xlu0 0
    %1140 = vperm.xlu0 %1139, %v1106
    %v1141 = vpop.permute.xlu0 %1140
    %1144 = vset.pattern.permute.xlu0 0
    %1145 = vperm.xlu0 %1144, %v1107
    %v1146 = vpop.permute.xlu0 %1145
    %v1148 = vmul.f32 %v215, %v1111
    %v1149 = vmul.f32 %v217, %v1111
    %v1150 = vmul.f32 %v328, %v1111
    %v1151 = vmul.f32 %v330, %v1111
    %v1152 = vmul.f32 %v441, %v1111
    %v1153 = vmul.f32 %v443, %v1111
    %v1154 = vmul.f32 %v554, %v1111
    %v1155 = vmul.f32 %v556, %v1111
    %v1156 = vmul.f32 %v221, %v1116
    %v1157 = vmul.f32 %v223, %v1116
    %v1158 = vmul.f32 %v334, %v1116
    %v1159 = vmul.f32 %v336, %v1116
    %v1160 = vmul.f32 %v447, %v1116
    %v1161 = vmul.f32 %v449, %v1116
    %v1162 = vmul.f32 %v560, %v1116
    %v1163 = vmul.f32 %v562, %v1116
    %v1164 = vmul.f32 %v227, %v1121
    %v1165 = vmul.f32 %v229, %v1121
    %v1166 = vmul.f32 %v340, %v1121
    %v1167 = vmul.f32 %v342, %v1121
    %v1168 = vmul.f32 %v453, %v1121
    %v1169 = vmul.f32 %v455, %v1121
    %v1170 = vmul.f32 %v566, %v1121
    %v1171 = vmul.f32 %v568, %v1121
    %v1172 = vmul.f32 %v233, %v1126
    %v1173 = vmul.f32 %v235, %v1126
    %v1174 = vmul.f32 %v346, %v1126
    %v1175 = vmul.f32 %v348, %v1126
    %v1176 = vmul.f32 %v459, %v1126
    %v1177 = vmul.f32 %v461, %v1126
    %v1178 = vmul.f32 %v572, %v1126
    %v1179 = vmul.f32 %v574, %v1126
    %v1180 = vmul.f32 %v239, %v1131
    %v1181 = vmul.f32 %v241, %v1131
    %v1182 = vmul.f32 %v352, %v1131
    %v1183 = vmul.f32 %v354, %v1131
    %v1184 = vmul.f32 %v465, %v1131
    %v1185 = vmul.f32 %v467, %v1131
    %v1186 = vmul.f32 %v578, %v1131
    %v1187 = vmul.f32 %v580, %v1131
    %v1188 = vmul.f32 %v245, %v1136
    %v1189 = vmul.f32 %v247, %v1136
    %v1190 = vmul.f32 %v358, %v1136
    %v1191 = vmul.f32 %v360, %v1136
    %v1192 = vmul.f32 %v471, %v1136
    %v1193 = vmul.f32 %v473, %v1136
    %v1194 = vmul.f32 %v584, %v1136
    %v1195 = vmul.f32 %v586, %v1136
    %v1196 = vmul.f32 %v251, %v1141
    %v1197 = vmul.f32 %v253, %v1141
    %v1198 = vmul.f32 %v364, %v1141
    %v1199 = vmul.f32 %v366, %v1141
    %v1200 = vmul.f32 %v477, %v1141
    %v1201 = vmul.f32 %v479, %v1141
    %v1202 = vmul.f32 %v590, %v1141
    %v1203 = vmul.f32 %v592, %v1141
    %v1204 = vmul.f32 %v257, %v1146
    %v1205 = vmul.f32 %v259, %v1146
    %v1206 = vmul.f32 %v370, %v1146
    %v1207 = vmul.f32 %v372, %v1146
    %v1208 = vmul.f32 %v483, %v1146
    %v1209 = vmul.f32 %v485, %v1146
    %v1210 = vmul.f32 %v596, %v1146
    %v1211 = vmul.f32 %v598, %v1146
    %v1212 = vmul.f32 %v715, %v1111
    %v1213 = vmul.f32 %v717, %v1111
    %v1214 = vmul.f32 %v828, %v1111
    %v1215 = vmul.f32 %v830, %v1111
    %v1216 = vmul.f32 %v941, %v1111
    %v1217 = vmul.f32 %v943, %v1111
    %v1218 = vmul.f32 %v1054, %v1111
    %v1219 = vmul.f32 %v1056, %v1111
    %v1220 = vmul.f32 %v721, %v1116
    %v1221 = vmul.f32 %v723, %v1116
    %v1222 = vmul.f32 %v834, %v1116
    %v1223 = vmul.f32 %v836, %v1116
    %v1224 = vmul.f32 %v947, %v1116
    %v1225 = vmul.f32 %v949, %v1116
    %v1226 = vmul.f32 %v1060, %v1116
    %v1227 = vmul.f32 %v1062, %v1116
    %v1228 = vmul.f32 %v727, %v1121
    %v1229 = vmul.f32 %v729, %v1121
    %v1230 = vmul.f32 %v840, %v1121
    %v1231 = vmul.f32 %v842, %v1121
    %v1232 = vmul.f32 %v953, %v1121
    %v1233 = vmul.f32 %v955, %v1121
    %v1234 = vmul.f32 %v1066, %v1121
    %v1235 = vmul.f32 %v1068, %v1121
    %v1236 = vmul.f32 %v733, %v1126
    %v1237 = vmul.f32 %v735, %v1126
    %v1238 = vmul.f32 %v846, %v1126
    %v1239 = vmul.f32 %v848, %v1126
    %v1240 = vmul.f32 %v959, %v1126
    %v1241 = vmul.f32 %v961, %v1126
    %v1242 = vmul.f32 %v1072, %v1126
    %v1243 = vmul.f32 %v1074, %v1126
    %v1244 = vmul.f32 %v739, %v1131
    %v1245 = vmul.f32 %v741, %v1131
    %v1246 = vmul.f32 %v852, %v1131
    %v1247 = vmul.f32 %v854, %v1131
    %v1248 = vmul.f32 %v965, %v1131
    %v1249 = vmul.f32 %v967, %v1131
    %v1250 = vmul.f32 %v1078, %v1131
    %v1251 = vmul.f32 %v1080, %v1131
    %v1252 = vmul.f32 %v745, %v1136
    %v1253 = vmul.f32 %v747, %v1136
    %v1254 = vmul.f32 %v858, %v1136
    %v1255 = vmul.f32 %v860, %v1136
    %v1256 = vmul.f32 %v971, %v1136
    %v1257 = vmul.f32 %v973, %v1136
    %v1258 = vmul.f32 %v1084, %v1136
    %v1259 = vmul.f32 %v1086, %v1136
    %v1260 = vmul.f32 %v751, %v1141
    %v1261 = vmul.f32 %v753, %v1141
    %v1262 = vmul.f32 %v864, %v1141
    %v1263 = vmul.f32 %v866, %v1141
    %v1264 = vmul.f32 %v977, %v1141
    %v1265 = vmul.f32 %v979, %v1141
    %v1266 = vmul.f32 %v1090, %v1141
    %v1267 = vmul.f32 %v1092, %v1141
    %v1268 = vmul.f32 %v757, %v1146
    %v1269 = vmul.f32 %v759, %v1146
    %v1270 = vmul.f32 %v870, %v1146
    %v1271 = vmul.f32 %v872, %v1146
    %v1272 = vmul.f32 %v983, %v1146
    %v1273 = vmul.f32 %v985, %v1146
    %v1274 = vmul.f32 %v1096, %v1146
    %v1275 = vmul.f32 %v1098, %v1146
    %v1276 = vld [vmem:[%s3] sm:$0xff]
    %v1277 = vld [vmem:[%s3 + $0x8] sm:$0xff]
    %v1278 = vld [vmem:[%s3 + $0x10] sm:$0xff]
    %v1279 = vld [vmem:[%s3 + $0x18] sm:$0xff]
    %v1280 = vld [vmem:[%s3 + $0x20] sm:$0xff]
    %v1281 = vld [vmem:[%s3 + $0x28] sm:$0xff]
    %v1282 = vld [vmem:[%s3 + $0x30] sm:$0xff]
    %v1283 = vld [vmem:[%s3 + $0x38] sm:$0xff]
    %1285 = vset.pattern.permute.xlu0 0
    %1286 = vperm.xlu0 %1285, %v1276
    %v1287 = vpop.permute.xlu0 %1286
    %1290 = vset.pattern.permute.xlu0 0
    %1291 = vperm.xlu0 %1290, %v1277
    %v1292 = vpop.permute.xlu0 %1291
    %1295 = vset.pattern.permute.xlu0 0
    %1296 = vperm.xlu0 %1295, %v1278
    %v1297 = vpop.permute.xlu0 %1296
    %1300 = vset.pattern.permute.xlu0 0
    %1301 = vperm.xlu0 %1300, %v1279
    %v1302 = vpop.permute.xlu0 %1301
    %1305 = vset.pattern.permute.xlu0 0
    %1306 = vperm.xlu0 %1305, %v1280
    %v1307 = vpop.permute.xlu0 %1306
    %1310 = vset.pattern.permute.xlu0 0
    %1311 = vperm.xlu0 %1310, %v1281
    %v1312 = vpop.permute.xlu0 %1311
    %1315 = vset.pattern.permute.xlu0 0
    %1316 = vperm.xlu0 %1315, %v1282
    %v1317 = vpop.permute.xlu0 %1316
    %1320 = vset.pattern.permute.xlu0 0
    %1321 = vperm.xlu0 %1320, %v1283
    %v1322 = vpop.permute.xlu0 %1321
    %v1324 = vadd.f32 %v1148, %v1287
    %v1325 = vadd.f32 %v1149, %v1287
    %v1326 = vadd.f32 %v1150, %v1287
    %v1327 = vadd.f32 %v1151, %v1287
    %v1328 = vadd.f32 %v1152, %v1287
    %v1329 = vadd.f32 %v1153, %v1287
    %v1330 = vadd.f32 %v1154, %v1287
    %v1331 = vadd.f32 %v1155, %v1287
    %v1332 = vadd.f32 %v1156, %v1292
    %v1333 = vadd.f32 %v1157, %v1292
    %v1334 = vadd.f32 %v1158, %v1292
    %v1335 = vadd.f32 %v1159, %v1292
    %v1336 = vadd.f32 %v1160, %v1292
    %v1337 = vadd.f32 %v1161, %v1292
    %v1338 = vadd.f32 %v1162, %v1292
    %v1339 = vadd.f32 %v1163, %v1292
    %v1340 = vadd.f32 %v1164, %v1297
    %v1341 = vadd.f32 %v1165, %v1297
    %v1342 = vadd.f32 %v1166, %v1297
    %v1343 = vadd.f32 %v1167, %v1297
    %v1344 = vadd.f32 %v1168, %v1297
    %v1345 = vadd.f32 %v1169, %v1297
    %v1346 = vadd.f32 %v1170, %v1297
    %v1347 = vadd.f32 %v1171, %v1297
    %v1348 = vadd.f32 %v1172, %v1302
    %v1349 = vadd.f32 %v1173, %v1302
    %v1350 = vadd.f32 %v1174, %v1302
    %v1351 = vadd.f32 %v1175, %v1302
    %v1352 = vadd.f32 %v1176, %v1302
    %v1353 = vadd.f32 %v1177, %v1302
    %v1354 = vadd.f32 %v1178, %v1302
    %v1355 = vadd.f32 %v1179, %v1302
    %v1356 = vadd.f32 %v1180, %v1307
    %v1357 = vadd.f32 %v1181, %v1307
    %v1358 = vadd.f32 %v1182, %v1307
    %v1359 = vadd.f32 %v1183, %v1307
    %v1360 = vadd.f32 %v1184, %v1307
    %v1361 = vadd.f32 %v1185, %v1307
    %v1362 = vadd.f32 %v1186, %v1307
    %v1363 = vadd.f32 %v1187, %v1307
    %v1364 = vadd.f32 %v1188, %v1312
    %v1365 = vadd.f32 %v1189, %v1312
    %v1366 = vadd.f32 %v1190, %v1312
    %v1367 = vadd.f32 %v1191, %v1312
    %v1368 = vadd.f32 %v1192, %v1312
    %v1369 = vadd.f32 %v1193, %v1312
    %v1370 = vadd.f32 %v1194, %v1312
    %v1371 = vadd.f32 %v1195, %v1312
    %v1372 = vadd.f32 %v1196, %v1317
    %v1373 = vadd.f32 %v1197, %v1317
    %v1374 = vadd.f32 %v1198, %v1317
    %v1375 = vadd.f32 %v1199, %v1317
    %v1376 = vadd.f32 %v1200, %v1317
    %v1377 = vadd.f32 %v1201, %v1317
    %v1378 = vadd.f32 %v1202, %v1317
    %v1379 = vadd.f32 %v1203, %v1317
    %v1380 = vadd.f32 %v1204, %v1322
    %v1381 = vadd.f32 %v1205, %v1322
    %v1382 = vadd.f32 %v1206, %v1322
    %v1383 = vadd.f32 %v1207, %v1322
    %v1384 = vadd.f32 %v1208, %v1322
    %v1385 = vadd.f32 %v1209, %v1322
    %v1386 = vadd.f32 %v1210, %v1322
    %v1387 = vadd.f32 %v1211, %v1322
    %v1388 = vadd.f32 %v1212, %v1287
    %v1389 = vadd.f32 %v1213, %v1287
    %v1390 = vadd.f32 %v1214, %v1287
    %v1391 = vadd.f32 %v1215, %v1287
    %v1392 = vadd.f32 %v1216, %v1287
    %v1393 = vadd.f32 %v1217, %v1287
    %v1394 = vadd.f32 %v1218, %v1287
    %v1395 = vadd.f32 %v1219, %v1287
    %v1396 = vadd.f32 %v1220, %v1292
    %v1397 = vadd.f32 %v1221, %v1292
    %v1398 = vadd.f32 %v1222, %v1292
    %v1399 = vadd.f32 %v1223, %v1292
    %v1400 = vadd.f32 %v1224, %v1292
    %v1401 = vadd.f32 %v1225, %v1292
    %v1402 = vadd.f32 %v1226, %v1292
    %v1403 = vadd.f32 %v1227, %v1292
    %v1404 = vadd.f32 %v1228, %v1297
    %v1405 = vadd.f32 %v1229, %v1297
    %v1406 = vadd.f32 %v1230, %v1297
    %v1407 = vadd.f32 %v1231, %v1297
    %v1408 = vadd.f32 %v1232, %v1297
    %v1409 = vadd.f32 %v1233, %v1297
    %v1410 = vadd.f32 %v1234, %v1297
    %v1411 = vadd.f32 %v1235, %v1297
    %v1412 = vadd.f32 %v1236, %v1302
    %v1413 = vadd.f32 %v1237, %v1302
    %v1414 = vadd.f32 %v1238, %v1302
    %v1415 = vadd.f32 %v1239, %v1302
    %v1416 = vadd.f32 %v1240, %v1302
    %v1417 = vadd.f32 %v1241, %v1302
    %v1418 = vadd.f32 %v1242, %v1302
    %v1419 = vadd.f32 %v1243, %v1302
    %v1420 = vadd.f32 %v1244, %v1307
    %v1421 = vadd.f32 %v1245, %v1307
    %v1422 = vadd.f32 %v1246, %v1307
    %v1423 = vadd.f32 %v1247, %v1307
    %v1424 = vadd.f32 %v1248, %v1307
    %v1425 = vadd.f32 %v1249, %v1307
    %v1426 = vadd.f32 %v1250, %v1307
    %v1427 = vadd.f32 %v1251, %v1307
    %v1428 = vadd.f32 %v1252, %v1312
    %v1429 = vadd.f32 %v1253, %v1312
    %v1430 = vadd.f32 %v1254, %v1312
    %v1431 = vadd.f32 %v1255, %v1312
    %v1432 = vadd.f32 %v1256, %v1312
    %v1433 = vadd.f32 %v1257, %v1312
    %v1434 = vadd.f32 %v1258, %v1312
    %v1435 = vadd.f32 %v1259, %v1312
    %v1436 = vadd.f32 %v1260, %v1317
    %v1437 = vadd.f32 %v1261, %v1317
    %v1438 = vadd.f32 %v1262, %v1317
    %v1439 = vadd.f32 %v1263, %v1317
    %v1440 = vadd.f32 %v1264, %v1317
    %v1441 = vadd.f32 %v1265, %v1317
    %v1442 = vadd.f32 %v1266, %v1317
    %v1443 = vadd.f32 %v1267, %v1317
    %v1444 = vadd.f32 %v1268, %v1322
    %v1445 = vadd.f32 %v1269, %v1322
    %v1446 = vadd.f32 %v1270, %v1322
    %v1447 = vadd.f32 %v1271, %v1322
    %v1448 = vadd.f32 %v1272, %v1322
    %v1449 = vadd.f32 %v1273, %v1322
    %v1450 = vadd.f32 %v1274, %v1322
    %v1451 = vadd.f32 %v1275, %v1322
    %v1452 = vmax.f32 %v1324, 0.0
    %v1453 = vmax.f32 %v1325, 0.0
    %v1454 = vmax.f32 %v1326, 0.0
    %v1455 = vmax.f32 %v1327, 0.0
    %v1456 = vmax.f32 %v1328, 0.0
    %v1457 = vmax.f32 %v1329, 0.0
    %v1458 = vmax.f32 %v1330, 0.0
    %v1459 = vmax.f32 %v1331, 0.0
    %v1460 = vmax.f32 %v1332, 0.0
    %v1461 = vmax.f32 %v1333, 0.0
    %v1462 = vmax.f32 %v1334, 0.0
    %v1463 = vmax.f32 %v1335, 0.0
    %v1464 = vmax.f32 %v1336, 0.0
    %v1465 = vmax.f32 %v1337, 0.0
    %v1466 = vmax.f32 %v1338, 0.0
    %v1467 = vmax.f32 %v1339, 0.0
    %v1468 = vmax.f32 %v1340, 0.0
    %v1469 = vmax.f32 %v1341, 0.0
    %v1470 = vmax.f32 %v1342, 0.0
    %v1471 = vmax.f32 %v1343, 0.0
    %v1472 = vmax.f32 %v1344, 0.0
    %v1473 = vmax.f32 %v1345, 0.0
    %v1474 = vmax.f32 %v1346, 0.0
    %v1475 = vmax.f32 %v1347, 0.0
    %v1476 = vmax.f32 %v1348, 0.0
    %v1477 = vmax.f32 %v1349, 0.0
    %v1478 = vmax.f32 %v1350, 0.0
    %v1479 = vmax.f32 %v1351, 0.0
    %v1480 = vmax.f32 %v1352, 0.0
    %v1481 = vmax.f32 %v1353, 0.0
    %v1482 = vmax.f32 %v1354, 0.0
    %v1483 = vmax.f32 %v1355, 0.0
    %v1484 = vmax.f32 %v1356, 0.0
    %v1485 = vmax.f32 %v1357, 0.0
    %v1486 = vmax.f32 %v1358, 0.0
    %v1487 = vmax.f32 %v1359, 0.0
    %v1488 = vmax.f32 %v1360, 0.0
    %v1489 = vmax.f32 %v1361, 0.0
    %v1490 = vmax.f32 %v1362, 0.0
    %v1491 = vmax.f32 %v1363, 0.0
    %v1492 = vmax.f32 %v1364, 0.0
    %v1493 = vmax.f32 %v1365, 0.0
    %v1494 = vmax.f32 %v1366, 0.0
    %v1495 = vmax.f32 %v1367, 0.0
    %v1496 = vmax.f32 %v1368, 0.0
    %v1497 = vmax.f32 %v1369, 0.0
    %v1498 = vmax.f32 %v1370, 0.0
    %v1499 = vmax.f32 %v1371, 0.0
    %v1500 = vmax.f32 %v1372, 0.0
    %v1501 = vmax.f32 %v1373, 0.0
    %v1502 = vmax.f32 %v1374, 0.0
    %v1503 = vmax.f32 %v1375, 0.0
    %v1504 = vmax.f32 %v1376, 0.0
    %v1505 = vmax.f32 %v1377, 0.0
    %v1506 = vmax.f32 %v1378, 0.0
    %v1507 = vmax.f32 %v1379, 0.0
    %v1508 = vmax.f32 %v1380, 0.0
    %v1509 = vmax.f32 %v1381, 0.0
    %v1510 = vmax.f32 %v1382, 0.0
    %v1511 = vmax.f32 %v1383, 0.0
    %v1512 = vmax.f32 %v1384, 0.0
    %v1513 = vmax.f32 %v1385, 0.0
    %v1514 = vmax.f32 %v1386, 0.0
    %v1515 = vmax.f32 %v1387, 0.0
    %v1516 = vmax.f32 %v1388, 0.0
    %v1517 = vmax.f32 %v1389, 0.0
    %v1518 = vmax.f32 %v1390, 0.0
    %v1519 = vmax.f32 %v1391, 0.0
    %v1520 = vmax.f32 %v1392, 0.0
    %v1521 = vmax.f32 %v1393, 0.0
    %v1522 = vmax.f32 %v1394, 0.0
    %v1523 = vmax.f32 %v1395, 0.0
    %v1524 = vmax.f32 %v1396, 0.0
    %v1525 = vmax.f32 %v1397, 0.0
    %v1526 = vmax.f32 %v1398, 0.0
    %v1527 = vmax.f32 %v1399, 0.0
    %v1528 = vmax.f32 %v1400, 0.0
    %v1529 = vmax.f32 %v1401, 0.0
    %v1530 = vmax.f32 %v1402, 0.0
    %v1531 = vmax.f32 %v1403, 0.0
    %v1532 = vmax.f32 %v1404, 0.0
    %v1533 = vmax.f32 %v1405, 0.0
    %v1534 = vmax.f32 %v1406, 0.0
    %v1535 = vmax.f32 %v1407, 0.0
    %v1536 = vmax.f32 %v1408, 0.0
    %v1537 = vmax.f32 %v1409, 0.0
    %v1538 = vmax.f32 %v1410, 0.0
    %v1539 = vmax.f32 %v1411, 0.0
    %v1540 = vmax.f32 %v1412, 0.0
    %v1541 = vmax.f32 %v1413, 0.0
    %v1542 = vmax.f32 %v1414, 0.0
    %v1543 = vmax.f32 %v1415, 0.0
    %v1544 = vmax.f32 %v1416, 0.0
    %v1545 = vmax.f32 %v1417, 0.0
    %v1546 = vmax.f32 %v1418, 0.0
    %v1547 = vmax.f32 %v1419, 0.0
    %v1548 = vmax.f32 %v1420, 0.0
    %v1549 = vmax.f32 %v1421, 0.0
    %v1550 = vmax.f32 %v1422, 0.0
    %v1551 = vmax.f32 %v1423, 0.0
    %v1552 = vmax.f32 %v1424, 0.0
    %v1553 = vmax.f32 %v1425, 0.0
    %v1554 = vmax.f32 %v1426, 0.0
    %v1555 = vmax.f32 %v1427, 0.0
    %v1556 = vmax.f32 %v1428, 0.0
    %v1557 = vmax.f32 %v1429, 0.0
    %v1558 = vmax.f32 %v1430, 0.0
    %v1559 = vmax.f32 %v1431, 0.0
    %v1560 = vmax.f32 %v1432, 0.0
    %v1561 = vmax.f32 %v1433, 0.0
    %v1562 = vmax.f32 %v1434, 0.0
    %v1563 = vmax.f32 %v1435, 0.0
    %v1564 = vmax.f32 %v1436, 0.0
    %v1565 = vmax.f32 %v1437, 0.0
    %v1566 = vmax.f32 %v1438, 0.0
    %v1567 = vmax.f32 %v1439, 0.0
    %v1568 = vmax.f32 %v1440, 0.0
    %v1569 = vmax.f32 %v1441, 0.0
    %v1570 = vmax.f32 %v1442, 0.0
    %v1571 = vmax.f32 %v1443, 0.0
    %v1572 = vmax.f32 %v1444, 0.0
    %v1573 = vmax.f32 %v1445, 0.0
    %v1574 = vmax.f32 %v1446, 0.0
    %v1575 = vmax.f32 %v1447, 0.0
    %v1576 = vmax.f32 %v1448, 0.0
    %v1577 = vmax.f32 %v1449, 0.0
    %v1578 = vmax.f32 %v1450, 0.0
    %v1579 = vmax.f32 %v1451, 0.0
    %v1580 = vmax.f32 %v1452, %v1454
    %v1581 = vmax.f32 %v1453, %v1455
    %v1582 = vmax.f32 %v1460, %v1462
    %v1583 = vmax.f32 %v1461, %v1463
    %v1584 = vmax.f32 %v1468, %v1470
    %v1585 = vmax.f32 %v1469, %v1471
    %v1586 = vmax.f32 %v1476, %v1478
    %v1587 = vmax.f32 %v1477, %v1479
    %v1588 = vmax.f32 %v1484, %v1486
    %v1589 = vmax.f32 %v1485, %v1487
    %v1590 = vmax.f32 %v1492, %v1494
    %v1591 = vmax.f32 %v1493, %v1495
    %v1592 = vmax.f32 %v1500, %v1502
    %v1593 = vmax.f32 %v1501, %v1503
    %v1594 = vmax.f32 %v1508, %v1510
    %v1595 = vmax.f32 %v1509, %v1511
    %v1596 = vmax.f32 %v1516, %v1518
    %v1597 = vmax.f32 %v1517, %v1519
    %v1598 = vmax.f32 %v1524, %v1526
    %v1599 = vmax.f32 %v1525, %v1527
    %v1600 = vmax.f32 %v1532, %v1534
    %v1601 = vmax.f32 %v1533, %v1535
    %v1602 = vmax.f32 %v1540, %v1542
    %v1603 = vmax.f32 %v1541, %v1543
    %v1604 = vmax.f32 %v1548, %v1550
    %v1605 = vmax.f32 %v1549, %v1551
    %v1606 = vmax.f32 %v1556, %v1558
    %v1607 = vmax.f32 %v1557, %v1559
    %v1608 = vmax.f32 %v1564, %v1566
    %v1609 = vmax.f32 %v1565, %v1567
    %v1610 = vmax.f32 %v1572, %v1574
    %v1611 = vmax.f32 %v1573, %v1575
    %v1612 = vmax.f32 %v1456, %v1458
    %v1613 = vmax.f32 %v1457, %v1459
    %v1614 = vmax.f32 %v1464, %v1466
    %v1615 = vmax.f32 %v1465, %v1467
    %v1616 = vmax.f32 %v1472, %v1474
    %v1617 = vmax.f32 %v1473, %v1475
    %v1618 = vmax.f32 %v1480, %v1482
    %v1619 = vmax.f32 %v1481, %v1483
    %v1620 = vmax.f32 %v1488, %v1490
    %v1621 = vmax.f32 %v1489, %v1491
    %v1622 = vmax.f32 %v1496, %v1498
    %v1623 = vmax.f32 %v1497, %v1499
    %v1624 = vmax.f32 %v1504, %v1506
    %v1625 = vmax.f32 %v1505, %v1507
    %v1626 = vmax.f32 %v1512, %v1514
    %v1627 = vmax.f32 %v1513, %v1515
    %v1628 = vmax.f32 %v1520, %v1522
    %v1629 = vmax.f32 %v1521, %v1523
    %v1630 = vmax.f32 %v1528, %v1530
    %v1631 = vmax.f32 %v1529, %v1531
    %v1632 = vmax.f32 %v1536, %v1538
    %v1633 = vmax.f32 %v1537, %v1539
    %v1634 = vmax.f32 %v1544, %v1546
    %v1635 = vmax.f32 %v1545, %v1547
    %v1636 = vmax.f32 %v1552, %v1554
    %v1637 = vmax.f32 %v1553, %v1555
    %v1638 = vmax.f32 %v1560, %v1562
    %v1639 = vmax.f32 %v1561, %v1563
    %v1640 = vmax.f32 %v1568, %v1570
    %v1641 = vmax.f32 %v1569, %v1571
    %v1642 = vmax.f32 %v1576, %v1578
    %v1643 = vmax.f32 %v1577, %v1579
    %v1644 = vmax.f32 %v1580, %v1612
    %v1645 = vmax.f32 %v1581, %v1613
    %v1646 = vmax.f32 %v1582, %v1614
    %v1647 = vmax.f32 %v1583, %v1615
    %v1648 = vmax.f32 %v1584, %v1616
    %v1649 = vmax.f32 %v1585, %v1617
    %v1650 = vmax.f32 %v1586, %v1618
    %v1651 = vmax.f32 %v1587, %v1619
    %v1652 = vmax.f32 %v1588, %v1620
    %v1653 = vmax.f32 %v1589, %v1621
    %v1654 = vmax.f32 %v1590, %v1622
    %v1655 = vmax.f32 %v1591, %v1623
    %v1656 = vmax.f32 %v1592, %v1624
    %v1657 = vmax.f32 %v1593, %v1625
    %v1658 = vmax.f32 %v1594, %v1626
    %v1659 = vmax.f32 %v1595, %v1627
    %v1660 = vmax.f32 %v1596, %v1628
    %v1661 = vmax.f32 %v1597, %v1629
    %v1662 = vmax.f32 %v1598, %v1630
    %v1663 = vmax.f32 %v1599, %v1631
    %v1664 = vmax.f32 %v1600, %v1632
    %v1665 = vmax.f32 %v1601, %v1633
    %v1666 = vmax.f32 %v1602, %v1634
    %v1667 = vmax.f32 %v1603, %v1635
    %v1668 = vmax.f32 %v1604, %v1636
    %v1669 = vmax.f32 %v1605, %v1637
    %v1670 = vmax.f32 %v1606, %v1638
    %v1671 = vmax.f32 %v1607, %v1639
    %v1672 = vmax.f32 %v1608, %v1640
    %v1673 = vmax.f32 %v1609, %v1641
    %v1674 = vmax.f32 %v1610, %v1642
    %v1675 = vmax.f32 %v1611, %v1643
    %1676 = vst [vmem:[#allocation2] sm:$0xff] %v1644
    %1677 = vst [vmem:[#allocation2 + $0x8] sm:$0xff] %v1645
    %1678 = vst [vmem:[#allocation2 + $0x10] sm:$0xff] %v1646
    %1679 = vst [vmem:[#allocation2 + $0x18] sm:$0xff] %v1647
    %1680 = vst [vmem:[#allocation2 + $0x20] sm:$0xff] %v1648
    %1681 = vst [vmem:[#allocation2 + $0x28] sm:$0xff] %v1649
    %1682 = vst [vmem:[#allocation2 + $0x30] sm:$0xff] %v1650
    %1683 = vst [vmem:[#allocation2 + $0x38] sm:$0xff] %v1651
    %1684 = vst [vmem:[#allocation2 + $0x40] sm:$0xff] %v1652
    %1685 = vst [vmem:[#allocation2 + $0x48] sm:$0xff] %v1653
    %1686 = vst [vmem:[#allocation2 + $0x50] sm:$0xff] %v1654
    %1687 = vst [vmem:[#allocation2 + $0x58] sm:$0xff] %v1655
    %1688 = vst [vmem:[#allocation2 + $0x60] sm:$0xff] %v1656
    %1689 = vst [vmem:[#allocation2 + $0x68] sm:$0xff] %v1657
    %1690 = vst [vmem:[#allocation2 + $0x70] sm:$0xff] %v1658
    %1691 = vst [vmem:[#allocation2 + $0x78] sm:$0xff] %v1659
    %1692 = vst [vmem:[#allocation2 + $0x80] sm:$0xff] %v1660
    %1693 = vst [vmem:[#allocation2 + $0x88] sm:$0xff] %v1661
    %1694 = vst [vmem:[#allocation2 + $0x90] sm:$0xff] %v1662
    %1695 = vst [vmem:[#allocation2 + $0x98] sm:$0xff] %v1663
    %1696 = vst [vmem:[#allocation2 + $0xa0] sm:$0xff] %v1664
    %1697 = vst [vmem:[#allocation2 + $0xa8] sm:$0xff] %v1665
    %1698 = vst [vmem:[#allocation2 + $0xb0] sm:$0xff] %v1666
    %1699 = vst [vmem:[#allocation2 + $0xb8] sm:$0xff] %v1667
    %1700 = vst [vmem:[#allocation2 + $0xc0] sm:$0xff] %v1668
    %1701 = vst [vmem:[#allocation2 + $0xc8] sm:$0xff] %v1669
    %1702 = vst [vmem:[#allocation2 + $0xd0] sm:$0xff] %v1670
    %1703 = vst [vmem:[#allocation2 + $0xd8] sm:$0xff] %v1671
    %1704 = vst [vmem:[#allocation2 + $0xe0] sm:$0xff] %v1672
    %1705 = vst [vmem:[#allocation2 + $0xe8] sm:$0xff] %v1673
    %1706 = vst [vmem:[#allocation2 + $0xf0] sm:$0xff] %v1674
    %1707 = vst [vmem:[#allocation2 + $0xf8] sm:$0xff] %v1675
    // Predicated region
    $region18: #{tpu_custom_call.1} parent=1 // pred_check
      _
    $region19: #{tpu_custom_call.1} parent=1 // pred_check_branch
      %1709 = sbr.rel (0) target = $region21
    $region20: #{tpu_custom_call.1} parent=1 // pred_region
      %s1711 = ssub.s32 4096, 4096
      %1712 = vsyncadd [#allocation3], %s1711
      %s1713 = sshll.u32 [#allocation2], 4
      %s1714 = int_to_ptr.vmem [resolvable:$true] %s1713
      %1719 = dma.vmem_to_hbm [thread:$0]  %s1714, 4096, %s4, [#allocation3], 256, 256, 16
    $region21: #{tpu_custom_call.1} parent=1 // pred_fallthru
      _
    // Predicated region
    $region22: #{tpu_custom_call.1} parent=1 // pred_check
      _
    $region23: #{tpu_custom_call.1} parent=1 // pred_check_branch
      %1721 = sbr.rel (0) target = $region25
    $region24: #{tpu_custom_call.1} parent=1 // pred_region
      %1722 = dma.done [#allocation3], 4096
    $region25: #{tpu_custom_call.1} parent=1 // pred_fallthru
      _
    %1723 = vsyncpa [#allocation3], 1

</llo_original>
